<compile_context>
chip_gen: v7x
topology: tpu7x:2x2x1
jax: 0.10.0
libtpu: 0.0.40
codegen_flags: <defaults>
</compile_context>

<pallas_src>
import functools

import jax
import jax.numpy as jnp
import numpy as np
from jax.experimental import pallas as pl
from jax.experimental.pallas import tpu as pltpu

_LANE = 128
_VMEM_LIMIT = 32 * 1024 * 1024          # safe on v5e/v6e/v7x
_TILE_BUDGET = 4 * 1024 * 1024          # per-stream block byte budget


# ------------------------------- small helpers -------------------------------

def _ru(c, m=_LANE):
    return ((c + m - 1) // m) * m


def _row_tile(m, row_bytes, budget=_TILE_BUDGET, cap=1024):
    """Row tile for flat (M, C) kernels: byte-budgeted, sublane-friendly, never
    silently falls back to a whole-array block (cdiv grid + in-kernel mask)."""
    t = min(m, cap, max(8, budget // max(row_bytes, 1)))
    if t < m:
        t = max(8, (t // 8) * 8)
    return t


def _elu(z):
    return jnp.where(z > 0, z, jnp.expm1(jnp.minimum(z, 0.0)))


def _bn_scale_shift(col_sum, col_sq, m, gamma, beta, eps=1e-5):
    """Fold batch stats into a per-channel affine: z = y*scale + shift (f32, (1,C)).
    Note: E[y^2]-E[y]^2 in f32 is fine at these magnitudes; for very large
    |mean|/std use mean-subtracted partial sums instead."""
    mean = col_sum / m
    var = jnp.maximum(col_sq / m - mean * mean, 0.0)
    inv = gamma / jnp.sqrt(var + eps)
    return inv, beta - mean * inv


def _row_mask(tm, m_total):
    row = jax.lax.broadcasted_iota(jnp.int32, (tm, 1), 0) + pl.program_id(0) * tm
    return row < m_total


# ----------------------------- Pallas kernel bodies ---------------------------

def _conv1x1_stats_kernel(x_ref, w_ref, b_ref, y_ref, sum_ref, sq_ref, *, m_total):
    """y = x @ w + b (bf16 MXU, f32 accum) + per-tile partial channel sum/sumsq."""
    tm = x_ref.shape[0]
    y = jnp.dot(x_ref[...].astype(jnp.bfloat16), w_ref[...],
                preferred_element_type=jnp.float32) + b_ref[...]
    y_ref[...] = y.astype(y_ref.dtype)
    yv = jnp.where(_row_mask(tm, m_total), y, 0.0)
    sum_ref[...] = jnp.sum(yv, axis=0, keepdims=True)
    sq_ref[...] = jnp.sum(yv * yv, axis=0, keepdims=True)


def _conv2_fused_kernel(y1_ref, sc_ref, sh_ref, w_ref, b_ref,
                        y2_ref, sum_ref, sq_ref, halo_ref, *, stride, c):
    """BN1+ELU(y1) -> zero-padded, phase-decomposed VMEM halo -> 9 tap matmuls
    (stride-aware) -> y2 + per-image partial BN2 stats.  Only contiguous slices."""
    s = stride
    Hq, Wq = y1_ref.shape[1], y1_ref.shape[3]          # == Ho, Wo (H,W % s == 0)
    Ho, Wo = y2_ref.shape[1], y2_ref.shape[2]

    halo_ref[...] = jnp.zeros_like(halo_ref)           # zero border = conv2 pad

    # y1 block is the free (H//s, s, W//s, s*C) phase view; BN params are tiled xs.
    v = y1_ref[...].reshape(Hq, s, Wq, s * c).astype(jnp.float32)
    a = _elu(v * sc_ref[...] + sh_ref[...]).astype(jnp.bfloat16)

    # Scatter the s*s phase planes of a1 into the padded halo scratch:
    # a1 phase v lands in padded-phase (v+1)%s at offset (v+1)//s.
    for vr in range(s):
        pr, ro = (vr + 1) % s, (vr + 1) // s
        for vc in range(s):
            pc, co = (vc + 1) % s, (vc + 1) // s
            halo_ref[pr, pc, ro:ro + Hq, co:co + Wq, :] = a[:, vr, :, vc * c:(vc + 1) * c]

    # 3x3 tap (dh, dw) at stride s == contiguous window of phase (dh%s, dw%s).
    # TODO(synk): pair taps (K=2*C) on v6e/v7x when MXU-bound (256-deep MXU).
    acc = jnp.zeros((Ho * Wo, c), jnp.float32)
    for t in range(9):
        dh, dw = t // 3, t % 3
        tap = halo_ref[dh % s, dw % s, dh // s:dh // s + Ho, dw // s:dw // s + Wo, :]
        acc = acc + jnp.dot(tap.reshape(Ho * Wo, c), w_ref[t],
                            preferred_element_type=jnp.float32)
    y = acc + b_ref[...]
    y2_ref[...] = y.reshape(1, Ho, Wo, c).astype(y2_ref.dtype)
    sum_ref[...] = jnp.sum(y, axis=0, keepdims=True)
    sq_ref[...] = jnp.sum(y * y, axis=0, keepdims=True)


def _conv34_residual_stats_kernel(y2_ref, xs_ref, sc_ref, sh_ref, w3_ref, b3_ref,
                                  w4_ref, b4_ref, s_ref, sum_ref, sq_ref, *, m_total):
    """s = conv3(ELU(BN(y2))) + conv4(x_strided) + biases, fused residual add
    and per-tile partial BN3 stats."""
    tm = y2_ref.shape[0]
    a2 = _elu(y2_ref[...].astype(jnp.float32) * sc_ref[...] + sh_ref[...])
    acc = jnp.dot(a2.astype(jnp.bfloat16), w3_ref[...],
                  preferred_element_type=jnp.float32)
    acc = acc + jnp.dot(xs_ref[...].astype(jnp.bfloat16), w4_ref[...],
                        preferred_element_type=jnp.float32)
    acc = acc + b3_ref[...] + b4_ref[...]
    s_ref[...] = acc.astype(s_ref.dtype)
    av = jnp.where(_row_mask(tm, m_total), acc, 0.0)
    sum_ref[...] = jnp.sum(av, axis=0, keepdims=True)
    sq_ref[...] = jnp.sum(av * av, axis=0, keepdims=True)


def _bn_elu_kernel(x_ref, sc_ref, sh_ref, o_ref, *, c_out):
    z = _elu(x_ref[...].astype(jnp.float32) * sc_ref[...] + sh_ref[...])
    o_ref[...] = z[:, :c_out]                 # fold away the channel padding


# ------------------------------ pallas_call wrappers ---------------------------

def conv1x1_stats(x_flat, w, b):
    M, K = x_flat.shape
    Nc = w.shape[1]
    tm = _row_tile(M, row_bytes=K * 4 + Nc * 10)
    grid = pl.cdiv(M, tm)
    kern = functools.partial(_conv1x1_stats_kernel, m_total=M)
    y, ps, pq = pl.pallas_call(
        kern,
        out_shape=(jax.ShapeDtypeStruct((M, Nc), jnp.bfloat16),
                   jax.ShapeDtypeStruct((grid, Nc), jnp.float32),
                   jax.ShapeDtypeStruct((grid, Nc), jnp.float32)),
        grid=(grid,),
        in_specs=[pl.BlockSpec((tm, K), lambda i: (i, 0)),
                  pl.BlockSpec((K, Nc), lambda i: (0, 0)),
                  pl.BlockSpec((1, Nc), lambda i: (0, 0))],
        out_specs=(pl.BlockSpec((tm, Nc), lambda i: (i, 0)),
                   pl.BlockSpec((1, Nc), lambda i: (i, 0)),
                   pl.BlockSpec((1, Nc), lambda i: (i, 0))),
        compiler_params=pltpu.CompilerParams(
            dimension_semantics=("parallel",), vmem_limit_bytes=_VMEM_LIMIT),
    )(x_flat, w, b)
    return y, ps.sum(axis=0, keepdims=True), pq.sum(axis=0, keepdims=True)


def conv2_fused(y1_flat, sc1, sh1, w2, b2, N, H, W, Cp, stride):
    s = stride
    # TODO(synk): support H % s != 0 / W % s != 0 (ragged phase planes).
    assert H % s == 0 and W % s == 0, "conv2_fused requires H, W divisible by stride"
    Ho, Wo = H // s, W // s
    q = pl.cdiv(2, s)                                    # halo rows/cols per phase
    R, Rw = Ho + q, Wo + q
    y1_r = y1_flat.reshape(N, Ho, s, Wo, s * Cp)         # pure metadata reshape
    sc_d = jnp.tile(sc1, (1, s))
    sh_d = jnp.tile(sh1, (1, s))
    kern = functools.partial(_conv2_fused_kernel, stride=s, c=Cp)
    # TODO(synk): band-tile over output rows (overlapping halo windows) for large H*W.
    y2, ps, pq = pl.pallas_call(
        kern,
        out_shape=(jax.ShapeDtypeStruct((N, Ho, Wo, Cp), jnp.bfloat16),
                   jax.ShapeDtypeStruct((N, Cp), jnp.float32),
                   jax.ShapeDtypeStruct((N, Cp), jnp.float32)),
        grid=(N,),
        in_specs=[pl.BlockSpec((1, Ho, s, Wo, s * Cp), lambda n: (n, 0, 0, 0, 0)),
                  pl.BlockSpec((1, s * Cp), lambda n: (0, 0)),
                  pl.BlockSpec((1, s * Cp), lambda n: (0, 0)),
                  pl.BlockSpec((9, Cp, Cp), lambda n: (0, 0, 0)),
                  pl.BlockSpec((1, Cp), lambda n: (0, 0))],
        out_specs=(pl.BlockSpec((1, Ho, Wo, Cp), lambda n: (n, 0, 0, 0)),
                   pl.BlockSpec((1, Cp), lambda n: (n, 0)),
                   pl.BlockSpec((1, Cp), lambda n: (n, 0))),
        scratch_shapes=[pltpu.VMEM((s, s, R, Rw, Cp), jnp.bfloat16)],
        compiler_params=pltpu.CompilerParams(
            dimension_semantics=("parallel",), vmem_limit_bytes=_VMEM_LIMIT),
    )(y1_r, sc_d, sh_d, w2, b2)
    return y2, ps.sum(axis=0, keepdims=True), pq.sum(axis=0, keepdims=True)


def conv34_residual_stats(y2f, xsf, scale2, shift2, w3, b3, w4, b4):
    M, Cm = y2f.shape
    Ci = xsf.shape[1]
    C4 = w3.shape[1]
    tm = _row_tile(M, row_bytes=Cm * 6 + Ci * 4 + C4 * 6)
    grid = pl.cdiv(M, tm)
    kern = functools.partial(_conv34_residual_stats_kernel, m_total=M)
    r, ps, pq = pl.pallas_call(
        kern,
        out_shape=(jax.ShapeDtypeStruct((M, C4), jnp.bfloat16),
                   jax.ShapeDtypeStruct((grid, C4), jnp.float32),
                   jax.ShapeDtypeStruct((grid, C4), jnp.float32)),
        grid=(grid,),
        in_specs=[pl.BlockSpec((tm, Cm), lambda i: (i, 0)),
                  pl.BlockSpec((tm, Ci), lambda i: (i, 0)),
                  pl.BlockSpec((1, Cm), lambda i: (0, 0)),
                  pl.BlockSpec((1, Cm), lambda i: (0, 0)),
                  pl.BlockSpec((Cm, C4), lambda i: (0, 0)),
                  pl.BlockSpec((1, C4), lambda i: (0, 0)),
                  pl.BlockSpec((Ci, C4), lambda i: (0, 0)),
                  pl.BlockSpec((1, C4), lambda i: (0, 0))],
        out_specs=(pl.BlockSpec((tm, C4), lambda i: (i, 0)),
                   pl.BlockSpec((1, C4), lambda i: (i, 0)),
                   pl.BlockSpec((1, C4), lambda i: (i, 0))),
        compiler_params=pltpu.CompilerParams(
            dimension_semantics=("parallel",), vmem_limit_bytes=_VMEM_LIMIT),
    )(y2f, xsf, scale2, shift2, w3, b3, w4, b4)
    return r, ps.sum(axis=0, keepdims=True), pq.sum(axis=0, keepdims=True)


def bn_elu(x, scale, shift, c_out):
    M, C = x.shape
    tm = _row_tile(M, row_bytes=C * 2 + C * 4 + c_out * 4)
    grid = pl.cdiv(M, tm)
    kern = functools.partial(_bn_elu_kernel, c_out=c_out)
    return pl.pallas_call(
        kern,
        out_shape=jax.ShapeDtypeStruct((M, c_out), jnp.float32),
        grid=(grid,),
        in_specs=[pl.BlockSpec((tm, C), lambda i: (i, 0)),
                  pl.BlockSpec((1, C), lambda i: (0, 0)),
                  pl.BlockSpec((1, C), lambda i: (0, 0))],
        out_specs=pl.BlockSpec((tm, c_out), lambda i: (i, 0)),
        compiler_params=pltpu.CompilerParams(
            dimension_semantics=("parallel",), vmem_limit_bytes=_VMEM_LIMIT),
    )(x, scale, shift)


# -------------------------------- parameters ----------------------------------

def init_params(key, cin, cout):
    """Weights in matmul layout: (k*k*Cin, Cout), tap-major / channel-minor."""
    ks = jax.random.split(key, 14)
    sc = 0.1
    p = {}
    p['w1'] = sc * jax.random.normal(ks[0], (cin, cout), jnp.float32)
    p['b1'] = sc * jax.random.normal(ks[1], (cout,), jnp.float32)
    p['g1'] = 1.0 + sc * jax.random.normal(ks[2], (cout,), jnp.float32)
    p['be1'] = sc * jax.random.normal(ks[3], (cout,), jnp.float32)
    p['w2'] = sc * jax.random.normal(ks[4], (9 * cout, cout), jnp.float32)
    p['b2'] = sc * jax.random.normal(ks[5], (cout,), jnp.float32)
    p['g2'] = 1.0 + sc * jax.random.normal(ks[6], (cout,), jnp.float32)
    p['be2'] = sc * jax.random.normal(ks[7], (cout,), jnp.float32)
    p['w3'] = sc * jax.random.normal(ks[8], (cout, 4 * cout), jnp.float32)
    p['b3'] = sc * jax.random.normal(ks[9], (4 * cout,), jnp.float32)
    p['w4'] = sc * jax.random.normal(ks[10], (cin, 4 * cout), jnp.float32)
    p['b4'] = sc * jax.random.normal(ks[11], (4 * cout,), jnp.float32)
    p['g3'] = 1.0 + sc * jax.random.normal(ks[12], (4 * cout,), jnp.float32)
    p['be3'] = sc * jax.random.normal(ks[13], (4 * cout,), jnp.float32)
    return p


def pack_params(p):
    """Pad *output* channel dims to 128-lane multiples (exact zeros), bf16 weights.
    The contraction (Cin) dims stay narrow -> no inflated input tensors in HBM."""
    cin, cout = p['w1'].shape
    c4 = p['w3'].shape[1]
    CPm, CP4 = _ru(cout), _ru(c4)

    def padc(w, c):
        return jnp.pad(w, ((0, 0), (0, c - w.shape[1])))

    def padv(v, c):
        return jnp.pad(v, (0, c - v.shape[0])).reshape(1, c).astype(jnp.float32)

    pp = {}
    pp['w1'] = padc(p['w1'], CPm).astype(jnp.bfloat16)                      # (Cin, CPm)
    pp['b1'] = padv(p['b1'], CPm)
    pp['g1'] = padv(p['g1'], CPm)
    pp['be1'] = padv(p['be1'], CPm)
    w2 = p['w2'].reshape(9, cout, cout)
    pp['w2'] = jnp.pad(w2, ((0, 0), (0, CPm - cout), (0, CPm - cout))).astype(jnp.bfloat16)
    pp['b2'] = padv(p['b2'], CPm)
    pp['g2'] = padv(p['g2'], CPm)
    pp['be2'] = padv(p['be2'], CPm)
    pp['w3'] = jnp.pad(p['w3'], ((0, CPm - cout), (0, CP4 - c4))).astype(jnp.bfloat16)
    pp['b3'] = padv(p['b3'], CP4)
    pp['w4'] = padc(p['w4'], CP4).astype(jnp.bfloat16)                      # (Cin, CP4)
    pp['b4'] = padv(p['b4'], CP4)
    pp['g3'] = padv(p['g3'], CP4)
    pp['be3'] = padv(p['be3'], CP4)
    pp['c4'] = c4
    return pp


# ------------------------------ resconv forward --------------------------------

def resconv_forward(x_nchw, pp, stride):
    x = jnp.transpose(x_nchw, (0, 2, 3, 1)).astype(jnp.float32)     # NCHW -> NHWC
    N, H, W, Cin = x.shape
    CPm = pp['w1'].shape[1]
    c4 = pp['c4']
    s = stride
    Ho = (H - 1) // s + 1
    Wo = (W - 1) // s + 1
    M1 = N * H * W
    M2 = N * Ho * Wo

    # k1: conv1 (1x1) + BN1 stats (narrow-Cin LHS, cast to bf16 in-kernel)
    y1, s1, q1 = conv1x1_stats(x.reshape(M1, Cin), pp['w1'], pp['b1'])
    sc1, sh1 = _bn_scale_shift(s1, q1, M1, pp['g1'], pp['be1'])

    # k2: BN1+ELU + zero halo (VMEM scratch) + 3x3 strided conv + BN2 stats
    y2, s2, q2 = conv2_fused(y1, sc1, sh1, pp['w2'], pp['b2'], N, H, W, CPm, s)
    sc2, sh2 = _bn_scale_shift(s2, q2, M2, pp['g2'], pp['be2'])

    # stride-aware projection-shortcut input (narrow Cin, cheap XLA subsample)
    xs = x[:, ::s, ::s, :].reshape(M2, Cin)

    # k3: BN2+ELU -> conv3 + conv4 shortcut + residual add + BN3 stats
    r, s3, q3 = conv34_residual_stats(y2.reshape(M2, CPm), xs, sc2, sh2,
                                      pp['w3'], pp['b3'], pp['w4'], pp['b4'])
    sc3, sh3 = _bn_scale_shift(s3, q3, M2, pp['g3'], pp['be3'])

    # k4: final BN + ELU (channel padding dropped inside the kernel)
    out = bn_elu(r, sc3, sh3, c4)                                    # (M2, c4) f32
    return jnp.transpose(out.reshape(N, Ho, Wo, c4), (0, 3, 1, 2))   # NHWC -> NCHW


# ------------------------------ pure-JAX reference ------------------------------

def _ref_conv(x_nchw, w_mat, b, k, stride, pad, cast=None):
    cin = w_mat.shape[0] // (k * k)
    cout = w_mat.shape[1]
    w = w_mat.reshape(k, k, cin, cout).transpose(3, 2, 0, 1)         # -> OIHW
    xx, ww = x_nchw, w
    if cast is not None:                                             # mirror bf16 MXU
        xx = xx.astype(cast)
        ww = ww.astype(cast)
    y = jax.lax.conv_general_dilated(
        xx, ww, (stride, stride), [(pad, pad), (pad, pad)],
        dimension_numbers=('NCHW', 'OIHW', 'NCHW'),
        preferred_element_type=jnp.float32)
    return y + b[None, :, None, None]


def _ref_bn_elu(y, gamma, beta, eps=1e-5):
    mean = jnp.mean(y, axis=(0, 2, 3), keepdims=True)
    var = jnp.var(y, axis=(0, 2, 3), keepdims=True)
    z = (y - mean) / jnp.sqrt(var + eps) * gamma[None, :, None, None] + beta[None, :, None, None]
    return jnp.where(z > 0, z, jnp.expm1(jnp.minimum(z, 0.0)))


def _round(a, dtype):
    return a.astype(dtype).astype(jnp.float32) if dtype is not None else a


def resconv_reference(x, p, stride, cast=None, act_dtype=None):
    """act_dtype=bf16 additionally rounds the stored intermediates like the kernel."""
    y = _round(_ref_conv(x, p['w1'], p['b1'], 1, 1, 0, cast), act_dtype)
    a = _ref_bn_elu(y, p['g1'], p['be1'])
    y = _round(_ref_conv(a, p['w2'], p['b2'], 3, stride, 1, cast), act_dtype)
    a = _ref_bn_elu(y, p['g2'], p['be2'])
    y3 = _ref_conv(a, p['w3'], p['b3'], 1, 1, 0, cast)
    sc = _ref_conv(x, p['w4'], p['b4'], 1, stride, 0, cast)
    s = _round(y3 + sc, act_dtype)
    return _ref_bn_elu(s, p['g3'], p['be3'])


# ----------------------------------- main ---------------------------------------

if __name__ == "__main__":
    key = jax.random.PRNGKey(0)
    kx, kp = jax.random.split(key)

    N, Cin, H, W = 2, 4, 16, 16
    Cout = 8

    x = jax.random.normal(kx, (N, Cin, H, W), jnp.float32)           # NCHW, like PyTorch
    params = init_params(kp, Cin, Cout)
    packed = pack_params(params)                                     # pad + bf16 once

    for stride in (2, 1):
        out = jax.block_until_ready(resconv_forward(x, packed, stride))
        Ho = (H - 1) // stride + 1
        Wo = (W - 1) // stride + 1
        assert out.shape == (N, 4 * Cout, Ho, Wo)

        # Tight check: reference with identical bf16 matmul inputs and bf16-rounded
        # intermediate activations (mirrors the kernel's storage dtypes).
        ref_b = resconv_reference(x, params, stride, cast=jnp.bfloat16,
                                  act_dtype=jnp.bfloat16)
        np.testing.assert_allclose(np.asarray(out), np.asarray(ref_b),
                                   rtol=3e-2, atol=3e-2)

        # Loose sanity check vs the full-f32 reference (bf16 rounding only).
        ref_f = resconv_reference(x, params, stride, cast=None)
        np.testing.assert_allclose(np.asarray(out), np.asarray(ref_f),
                                   rtol=1.5e-1, atol=1.5e-1)

    print("KERNEL_OK")
</pallas_src>

<mosaic_0001>
module attributes {stable_mosaic.version = 11 : i64} {
  func.func @_conv1x1_stats_kernel(%arg0: i32, %arg1: memref<512x4xf32, #tpu.memory_space<vmem>>, %arg2: memref<4x128xbf16, #tpu.memory_space<vmem>>, %arg3: memref<1x128xf32, #tpu.memory_space<vmem>>, %arg4: memref<512x128xbf16, #tpu.memory_space<vmem>>, %arg5: memref<1x128xf32, #tpu.memory_space<vmem>>, %arg6: memref<1x128xf32, #tpu.memory_space<vmem>>) attributes {dimension_semantics = [#tpu.dimension_semantics<parallel>], iteration_bounds = array<i64: 1>, scalar_prefetch = 0 : i64, scratch_operands = 0 : i64, tpu.core_type = #tpu.core_type<tc>, window_params = [{transform_indices = @transform_0, window_bounds = array<i64: 512, 4>}, {pipeline_mode = #tpu.pipeline_mode<synchronous>, transform_indices = @transform_1, window_bounds = array<i64: 4, 128>}, {pipeline_mode = #tpu.pipeline_mode<synchronous>, transform_indices = @transform_2, window_bounds = array<i64: 1, 128>}, {transform_indices = @transform_3, window_bounds = array<i64: 512, 128>}, {transform_indices = @transform_4, window_bounds = array<i64: 1, 128>}, {transform_indices = @transform_5, window_bounds = array<i64: 1, 128>}]} {
    %c0 = arith.constant 0 : index
    %c0_0 = arith.constant 0 : index
    %0 = vector.load %arg1[%c0, %c0_0] : memref<512x4xf32, #tpu.memory_space<vmem>>, vector<512x4xf32>
    %1 = arith.truncf %0 : vector<512x4xf32> to vector<512x4xbf16>
    %c0_1 = arith.constant 0 : index
    %c0_2 = arith.constant 0 : index
    %2 = vector.load %arg2[%c0_1, %c0_2] : memref<4x128xbf16, #tpu.memory_space<vmem>>, vector<4x128xbf16>
    %cst = arith.constant dense<0.000000e+00> : vector<512x128xf32>
    %3 = tpu.matmul %1, %2, %cst {dimension_numbers = #tpu.dot_dimension_numbers<[1], [0], [0], [1], [0, 0, 1, 1], [], []>} : vector<512x4xbf16>, vector<4x128xbf16>, vector<512x128xf32> -> vector<512x128xf32>
    %c0_3 = arith.constant 0 : index
    %c0_4 = arith.constant 0 : index
    %4 = vector.load %arg3[%c0_3, %c0_4] : memref<1x128xf32, #tpu.memory_space<vmem>>, vector<1x128xf32>
    %5 = vector.broadcast %4 : vector<1x128xf32> to vector<512x128xf32>
    %6 = arith.addf %3, %5 : vector<512x128xf32>
    %7 = arith.truncf %6 : vector<512x128xf32> to vector<512x128xbf16>
    %c0_5 = arith.constant 0 : index
    %c0_6 = arith.constant 0 : index
    %8 = vector.load %arg4[%c0_5, %c0_6] : memref<512x128xbf16, #tpu.memory_space<vmem>>, vector<512x128xbf16>
    tpu.vector_store %arg4[%c0_5, %c0_6], %7 {strides = array<i32>} : memref<512x128xbf16, #tpu.memory_space<vmem>>, vector<512x128xbf16>,
    %9 = tpu.iota {dimensions = array<i32: 0>} : vector<512x1xi32>
    %c512_i32 = arith.constant 512 : i32
    %10 = arith.muli %arg0, %c512_i32 : i32
    %11 = vector.broadcast %10 : i32 to vector<512x1xi32>
    %12 = arith.addi %9, %11 : vector<512x1xi32>
    %c512_i32_7 = arith.constant 512 : i32
    %13 = vector.broadcast %c512_i32_7 : i32 to vector<512x1xi32>
    %14 = arith.cmpi slt, %12, %13 : vector<512x1xi32>
    %cst_8 = arith.constant 0.000000e+00 : f32
    %15 = vector.shape_cast %14 : vector<512x1xi1> to vector<512x1xi1>
    %16 = vector.broadcast %15 : vector<512x1xi1> to vector<512x128xi1>
    %17 = vector.broadcast %cst_8 : f32 to vector<512x128xf32>
    %18 = arith.select %16, %6, %17 : vector<512x128xi1>, vector<512x128xf32>
    %cst_9 = arith.constant dense<0.000000e+00> : vector<128xf32>
    %19 = vector.multi_reduction <add>, %18, %cst_9 [0] : vector<512x128xf32> to vector<128xf32>
    %20 = vector.shape_cast %19 : vector<128xf32> to vector<1x128xf32>
    %c0_10 = arith.constant 0 : index
    %c0_11 = arith.constant 0 : index
    %21 = vector.load %arg5[%c0_10, %c0_11] : memref<1x128xf32, #tpu.memory_space<vmem>>, vector<1x128xf32>
    tpu.vector_store %arg5[%c0_10, %c0_11], %20 {strides = array<i32>} : memref<1x128xf32, #tpu.memory_space<vmem>>, vector<1x128xf32>,
    %22 = arith.mulf %18, %18 : vector<512x128xf32>
    %cst_12 = arith.constant dense<0.000000e+00> : vector<128xf32>
    %23 = vector.multi_reduction <add>, %22, %cst_12 [0] : vector<512x128xf32> to vector<128xf32>
    %24 = vector.shape_cast %23 : vector<128xf32> to vector<1x128xf32>
    %c0_13 = arith.constant 0 : index
    %c0_14 = arith.constant 0 : index
    %25 = vector.load %arg6[%c0_13, %c0_14] : memref<1x128xf32, #tpu.memory_space<vmem>>, vector<1x128xf32>
    tpu.vector_store %arg6[%c0_13, %c0_14], %24 {strides = array<i32>} : memref<1x128xf32, #tpu.memory_space<vmem>>, vector<1x128xf32>,
    return
  }
  func.func @transform_0(%arg0: i32) -> (i32, i32) {
    %c0_i32 = arith.constant 0 : i32
    %c0_i32_0 = arith.constant 0 : i32
    return %arg0, %c0_i32 : i32, i32
  }
  func.func @transform_1(%arg0: i32) -> (i32, i32) {
    %c0_i32 = arith.constant 0 : i32
    %c0_i32_0 = arith.constant 0 : i32
    %c0_i32_1 = arith.constant 0 : i32
    return %c0_i32, %c0_i32_0 : i32, i32
  }
  func.func @transform_2(%arg0: i32) -> (i32, i32) {
    %c0_i32 = arith.constant 0 : i32
    %c0_i32_0 = arith.constant 0 : i32
    %c0_i32_1 = arith.constant 0 : i32
    return %c0_i32, %c0_i32_0 : i32, i32
  }
  func.func @transform_3(%arg0: i32) -> (i32, i32) {
    %c0_i32 = arith.constant 0 : i32
    %c0_i32_0 = arith.constant 0 : i32
    return %arg0, %c0_i32 : i32, i32
  }
  func.func @transform_4(%arg0: i32) -> (i32, i32) {
    %c0_i32 = arith.constant 0 : i32
    %c0_i32_0 = arith.constant 0 : i32
    return %arg0, %c0_i32 : i32, i32
  }
  func.func @transform_5(%arg0: i32) -> (i32, i32) {
    %c0_i32 = arith.constant 0 : i32
    %c0_i32_0 = arith.constant 0 : i32
    return %arg0, %c0_i32 : i32, i32
  }
}

</mosaic_0001>

<llo_original>
// kernel: tpu_custom_call.1
$region0: #{tpu_custom_call.1}
  #allocation0 [shape = 'u32[]', space=smem, size = 0x4, offset = 0x4, fixed_abs, tag = 'smem constant byte address 0x4 - core index']
  #allocation1 [shape = 'u32[144,128]{1,0:T(1,128)}', space=vmem, size = 0x12000, scoped, tag = 'internal scratch']
  %s0 = inlined_call_operand.vmem [shape: f32[512,4], index: 0, kind: input, shape index: {}]
  %s1 = inlined_call_operand.vmem [shape: bf16[4,128], index: 1, kind: input, shape index: {}]
  %s2 = inlined_call_operand.vmem [shape: f32[1,128], index: 2, kind: input, shape index: {}]
  %s3 = inlined_call_operand.hbm [shape: bf16[512,128], index: 3, kind: output, shape index: {0}]
  %s4 = inlined_call_operand.hbm [shape: f32[1,128], index: 4, kind: output, shape index: {1}]
  %s5 = inlined_call_operand.hbm [shape: f32[1,128], index: 5, kind: output, shape index: {2}]
  %6 = xla_tuple %s3, %s4, %s5
  %s7 = sld [smem:[#allocation0]]
  $region38: #{tpu_custom_call.1} parent=0
    _
  %s9 = ssub.s32 1, %s7
  %s10 = scalar_select 0, %s9, %s7
  $region1: #{tpu_custom_call.1} parent=0
    #allocation2 [shape = 'u8[131072]{0}', space=vmem, size = 0x20000, scoped, tag = 'output window, operand 0, single buffered']
    #allocation3 [shape = 's32[1]{0}', space=sflag, size = 0x4, scoped, tag = 'scoped memory for tpu_custom_call.1']
    #allocation4 [shape = 'u8[512]{0}', space=vmem, size = 0x400, scoped, tag = 'output window, operand 1, single buffered']
    #allocation5 [shape = 's32[1]{0}', space=sflag, size = 0x4, scoped, tag = 'scoped memory for tpu_custom_call.1']
    #allocation6 [shape = 'u8[512]{0}', space=vmem, size = 0x400, scoped, tag = 'output window, operand 2, single buffered']
    %11 = vsyncpa [#allocation3], 0
    %12 = vsyncpa [#allocation5], 0
    // Predicated region
    $region2: #{tpu_custom_call.1} parent=1 // pred_check
      _
    $region3: #{tpu_custom_call.1} parent=1 // pred_check_branch
      %14 = sbr.rel (0) target = $region5
    $region4: #{tpu_custom_call.1} parent=1 // pred_region
      _
    $region5: #{tpu_custom_call.1} parent=1 // pred_fallthru
      _
    // Predicated region
    $region6: #{tpu_custom_call.1} parent=1 // pred_check
      _
    $region7: #{tpu_custom_call.1} parent=1 // pred_check_branch
      %16 = sbr.rel (0) target = $region9
    $region8: #{tpu_custom_call.1} parent=1 // pred_region
      _
    $region9: #{tpu_custom_call.1} parent=1 // pred_fallthru
      _
    // Predicated region
    $region10: #{tpu_custom_call.1} parent=1 // pred_check
      _
    $region11: #{tpu_custom_call.1} parent=1 // pred_check_branch
      %18 = sbr.rel (0) target = $region13
    $region12: #{tpu_custom_call.1} parent=1 // pred_region
      _
    $region13: #{tpu_custom_call.1} parent=1 // pred_fallthru
      _
    %v20 = vld [vmem:[%s0] sm:$0xff]
    %v21 = vld [vmem:[%s0 + $0x8] sm:$0xff]
    %v22 = vld [vmem:[%s0 + $0x10] sm:$0xff]
    %v23 = vld [vmem:[%s0 + $0x18] sm:$0xff]
    %v24 = vld [vmem:[%s0 + $0x20] sm:$0xff]
    %v25 = vld [vmem:[%s0 + $0x28] sm:$0xff]
    %v26 = vld [vmem:[%s0 + $0x30] sm:$0xff]
    %v27 = vld [vmem:[%s0 + $0x38] sm:$0xff]
    %v28 = vld [vmem:[%s0 + $0x40] sm:$0xff]
    %v29 = vld [vmem:[%s0 + $0x48] sm:$0xff]
    %v30 = vld [vmem:[%s0 + $0x50] sm:$0xff]
    %v31 = vld [vmem:[%s0 + $0x58] sm:$0xff]
    %v32 = vld [vmem:[%s0 + $0x60] sm:$0xff]
    %v33 = vld [vmem:[%s0 + $0x68] sm:$0xff]
    %v34 = vld [vmem:[%s0 + $0x70] sm:$0xff]
    %v35 = vld [vmem:[%s0 + $0x78] sm:$0xff]
    %v36 = vld [vmem:[%s0 + $0x80] sm:$0xff]
    %v37 = vld [vmem:[%s0 + $0x88] sm:$0xff]
    %v38 = vld [vmem:[%s0 + $0x90] sm:$0xff]
    %v39 = vld [vmem:[%s0 + $0x98] sm:$0xff]
    %v40 = vld [vmem:[%s0 + $0xa0] sm:$0xff]
    %v41 = vld [vmem:[%s0 + $0xa8] sm:$0xff]
    %v42 = vld [vmem:[%s0 + $0xb0] sm:$0xff]
    %v43 = vld [vmem:[%s0 + $0xb8] sm:$0xff]
    %v44 = vld [vmem:[%s0 + $0xc0] sm:$0xff]
    %v45 = vld [vmem:[%s0 + $0xc8] sm:$0xff]
    %v46 = vld [vmem:[%s0 + $0xd0] sm:$0xff]
    %v47 = vld [vmem:[%s0 + $0xd8] sm:$0xff]
    %v48 = vld [vmem:[%s0 + $0xe0] sm:$0xff]
    %v49 = vld [vmem:[%s0 + $0xe8] sm:$0xff]
    %v50 = vld [vmem:[%s0 + $0xf0] sm:$0xff]
    %v51 = vld [vmem:[%s0 + $0xf8] sm:$0xff]
    %v52 = vld [vmem:[%s0 + $0x100] sm:$0xff]
    %v53 = vld [vmem:[%s0 + $0x108] sm:$0xff]
    %v54 = vld [vmem:[%s0 + $0x110] sm:$0xff]
    %v55 = vld [vmem:[%s0 + $0x118] sm:$0xff]
    %v56 = vld [vmem:[%s0 + $0x120] sm:$0xff]
    %v57 = vld [vmem:[%s0 + $0x128] sm:$0xff]
    %v58 = vld [vmem:[%s0 + $0x130] sm:$0xff]
    %v59 = vld [vmem:[%s0 + $0x138] sm:$0xff]
    %v60 = vld [vmem:[%s0 + $0x140] sm:$0xff]
    %v61 = vld [vmem:[%s0 + $0x148] sm:$0xff]
    %v62 = vld [vmem:[%s0 + $0x150] sm:$0xff]
    %v63 = vld [vmem:[%s0 + $0x158] sm:$0xff]
    %v64 = vld [vmem:[%s0 + $0x160] sm:$0xff]
    %v65 = vld [vmem:[%s0 + $0x168] sm:$0xff]
    %v66 = vld [vmem:[%s0 + $0x170] sm:$0xff]
    %v67 = vld [vmem:[%s0 + $0x178] sm:$0xff]
    %v68 = vld [vmem:[%s0 + $0x180] sm:$0xff]
    %v69 = vld [vmem:[%s0 + $0x188] sm:$0xff]
    %v70 = vld [vmem:[%s0 + $0x190] sm:$0xff]
    %v71 = vld [vmem:[%s0 + $0x198] sm:$0xff]
    %v72 = vld [vmem:[%s0 + $0x1a0] sm:$0xff]
    %v73 = vld [vmem:[%s0 + $0x1a8] sm:$0xff]
    %v74 = vld [vmem:[%s0 + $0x1b0] sm:$0xff]
    %v75 = vld [vmem:[%s0 + $0x1b8] sm:$0xff]
    %v76 = vld [vmem:[%s0 + $0x1c0] sm:$0xff]
    %v77 = vld [vmem:[%s0 + $0x1c8] sm:$0xff]
    %v78 = vld [vmem:[%s0 + $0x1d0] sm:$0xff]
    %v79 = vld [vmem:[%s0 + $0x1d8] sm:$0xff]
    %v80 = vld [vmem:[%s0 + $0x1e0] sm:$0xff]
    %v81 = vld [vmem:[%s0 + $0x1e8] sm:$0xff]
    %v82 = vld [vmem:[%s0 + $0x1f0] sm:$0xff]
    %v83 = vld [vmem:[%s0 + $0x1f8] sm:$0xff]
    %v84 = vpack.c.bf16 %v21, %v20
    %v85 = vpack.c.bf16 %v23, %v22
    %v86 = vpack.c.bf16 %v25, %v24
    %v87 = vpack.c.bf16 %v27, %v26
    %v88 = vpack.c.bf16 %v29, %v28
    %v89 = vpack.c.bf16 %v31, %v30
    %v90 = vpack.c.bf16 %v33, %v32
    %v91 = vpack.c.bf16 %v35, %v34
    %v92 = vpack.c.bf16 %v37, %v36
    %v93 = vpack.c.bf16 %v39, %v38
    %v94 = vpack.c.bf16 %v41, %v40
    %v95 = vpack.c.bf16 %v43, %v42
    %v96 = vpack.c.bf16 %v45, %v44
    %v97 = vpack.c.bf16 %v47, %v46
    %v98 = vpack.c.bf16 %v49, %v48
    %v99 = vpack.c.bf16 %v51, %v50
    %v100 = vpack.c.bf16 %v53, %v52
    %v101 = vpack.c.bf16 %v55, %v54
    %v102 = vpack.c.bf16 %v57, %v56
    %v103 = vpack.c.bf16 %v59, %v58
    %v104 = vpack.c.bf16 %v61, %v60
    %v105 = vpack.c.bf16 %v63, %v62
    %v106 = vpack.c.bf16 %v65, %v64
    %v107 = vpack.c.bf16 %v67, %v66
    %v108 = vpack.c.bf16 %v69, %v68
    %v109 = vpack.c.bf16 %v71, %v70
    %v110 = vpack.c.bf16 %v73, %v72
    %v111 = vpack.c.bf16 %v75, %v74
    %v112 = vpack.c.bf16 %v77, %v76
    %v113 = vpack.c.bf16 %v79, %v78
    %v114 = vpack.c.bf16 %v81, %v80
    %v115 = vpack.c.bf16 %v83, %v82
    %v116 = vld [vmem:[%s1] sm:$0x3]
    %v117 = vld [vmem:[%s2] sm:$0x1]
    %v119 = vlaneseq
    %v120 = vshrl.u32 %v119, 7
    %v121 = vsub.s32 0, %v120
    %v122 = vrot.slane %v117, %v121
    %vm124 = vcmask 31744
    %v126 = vsel %vm124, %v84, 0
    %v129 = vsel %vm124, %v85, 0
    %v132 = vsel %vm124, %v86, 0
    %v135 = vsel %vm124, %v87, 0
    %v138 = vsel %vm124, %v88, 0
    %v141 = vsel %vm124, %v89, 0
    %v144 = vsel %vm124, %v90, 0
    %v147 = vsel %vm124, %v91, 0
    %v150 = vsel %vm124, %v92, 0
    %v153 = vsel %vm124, %v93, 0
    %v156 = vsel %vm124, %v94, 0
    %v159 = vsel %vm124, %v95, 0
    %v162 = vsel %vm124, %v96, 0
    %v165 = vsel %vm124, %v97, 0
    %v168 = vsel %vm124, %v98, 0
    %v171 = vsel %vm124, %v99, 0
    %v174 = vsel %vm124, %v100, 0
    %v177 = vsel %vm124, %v101, 0
    %v180 = vsel %vm124, %v102, 0
    %v183 = vsel %vm124, %v103, 0
    %v186 = vsel %vm124, %v104, 0
    %v189 = vsel %vm124, %v105, 0
    %v192 = vsel %vm124, %v106, 0
    %v195 = vsel %vm124, %v107, 0
    %v198 = vsel %vm124, %v108, 0
    %v201 = vsel %vm124, %v109, 0
    %v204 = vsel %vm124, %v110, 0
    %v207 = vsel %vm124, %v111, 0
    %v210 = vsel %vm124, %v112, 0
    %v213 = vsel %vm124, %v113, 0
    %v216 = vsel %vm124, %v114, 0
    %v219 = vsel %vm124, %v115, 0
    %vm221 = vcmask 1041408
    %v223 = vsel %vm221, %v116, 0
    %225 = vmatprep.subr.bf16.mxu0 0
    %226 = vmatpush1.bf16.msra.mxu0 %v223
    %227 = vmatprep.subr.bf16.mxu0 0
    %228 = vmatpush1.bf16.msra.mxu0 0
    %229 = vmatprep.subr.bf16.mxu0 0
    %230 = vmatpush1.bf16.msra.mxu0 0
    %231 = vmatprep.subr.bf16.mxu0 0
    %232 = vmatpush1.bf16.msra.mxu0 0
    %233 = vmatprep.subr.bf16.mxu0 0
    %234 = vmatpush1.bf16.msra.mxu0 0
    %235 = vmatprep.subr.bf16.mxu0 0
    %236 = vmatpush1.bf16.msra.mxu0 0
    %237 = vmatprep.subr.bf16.mxu0 0
    %238 = vmatpush1.bf16.msra.mxu0 0
    %239 = vmatprep.subr.bf16.mxu0 0
    %240 = vmatpush1.bf16.msra.mxu0 0
    %241 = vmatprep.subr.bf16.mxu0 0
    %242 = vmatpush1.bf16.msra.mxu0 0
    %243 = vmatprep.subr.bf16.mxu0 0
    %244 = vmatpush1.bf16.msra.mxu0 0
    %245 = vmatprep.subr.bf16.mxu0 0
    %246 = vmatpush1.bf16.msra.mxu0 0
    %247 = vmatprep.subr.bf16.mxu0 0
    %248 = vmatpush1.bf16.msra.mxu0 0
    %249 = vmatprep.subr.bf16.mxu0 0
    %250 = vmatpush1.bf16.msra.mxu0 0
    %251 = vmatprep.subr.bf16.mxu0 0
    %252 = vmatpush1.bf16.msra.mxu0 0
    %253 = vmatprep.subr.bf16.mxu0 0
    %254 = vmatpush1.bf16.msra.mxu0 0
    %255 = vmatprep.subr.bf16.mxu0 0
    %256 = vmatpush1.bf16.msra.mxu0 0
    %257 = vmatprep.mubr.bf16.mxu0 0
    %258 = vmatmul.mubr.bf16.gmra.mrb[0].mxu0 %v126
    %v259 = vpop.f32.mrb[0].mxu0
    %v260 = vadd.f32 %v122, %v259
    %v261 = vpop.f32.mrb[0].mxu0
    %v262 = vpop.f32.mrb[0].mxu0
    %v263 = vadd.f32 %v122, %v262
    %v264 = vpop.f32.mrb[0].mxu0
    %265 = vmatprep.mubr.bf16.mxu0 0
    %266 = vmatmul.mubr.bf16.gmra.mrb[0].mxu0 %v129
    %v267 = vpop.f32.mrb[0].mxu0
    %v268 = vadd.f32 %v122, %v267
    %v269 = vpop.f32.mrb[0].mxu0
    %v270 = vpop.f32.mrb[0].mxu0
    %v271 = vadd.f32 %v122, %v270
    %v272 = vpop.f32.mrb[0].mxu0
    %273 = vmatprep.mubr.bf16.mxu0 0
    %274 = vmatmul.mubr.bf16.gmra.mrb[0].mxu0 %v132
    %v275 = vpop.f32.mrb[0].mxu0
    %v276 = vadd.f32 %v122, %v275
    %v277 = vpop.f32.mrb[0].mxu0
    %v278 = vpop.f32.mrb[0].mxu0
    %v279 = vadd.f32 %v122, %v278
    %v280 = vpop.f32.mrb[0].mxu0
    %281 = vmatprep.mubr.bf16.mxu0 0
    %282 = vmatmul.mubr.bf16.gmra.mrb[0].mxu0 %v135
    %v283 = vpop.f32.mrb[0].mxu0
    %v284 = vadd.f32 %v122, %v283
    %v285 = vpop.f32.mrb[0].mxu0
    %v286 = vpop.f32.mrb[0].mxu0
    %v287 = vadd.f32 %v122, %v286
    %v288 = vpop.f32.mrb[0].mxu0
    %289 = vmatprep.mubr.bf16.mxu0 0
    %290 = vmatmul.mubr.bf16.gmra.mrb[0].mxu0 %v138
    %v291 = vpop.f32.mrb[0].mxu0
    %v292 = vadd.f32 %v122, %v291
    %v293 = vpop.f32.mrb[0].mxu0
    %v294 = vpop.f32.mrb[0].mxu0
    %v295 = vadd.f32 %v122, %v294
    %v296 = vpop.f32.mrb[0].mxu0
    %297 = vmatprep.mubr.bf16.mxu0 0
    %298 = vmatmul.mubr.bf16.gmra.mrb[0].mxu0 %v141
    %v299 = vpop.f32.mrb[0].mxu0
    %v300 = vadd.f32 %v122, %v299
    %v301 = vpop.f32.mrb[0].mxu0
    %v302 = vpop.f32.mrb[0].mxu0
    %v303 = vadd.f32 %v122, %v302
    %v304 = vpop.f32.mrb[0].mxu0
    %305 = vmatprep.mubr.bf16.mxu0 0
    %306 = vmatmul.mubr.bf16.gmra.mrb[0].mxu0 %v144
    %v307 = vpop.f32.mrb[0].mxu0
    %v308 = vadd.f32 %v122, %v307
    %v309 = vpop.f32.mrb[0].mxu0
    %v310 = vpop.f32.mrb[0].mxu0
    %v311 = vadd.f32 %v122, %v310
    %v312 = vpop.f32.mrb[0].mxu0
    %313 = vmatprep.mubr.bf16.mxu0 0
    %314 = vmatmul.mubr.bf16.gmra.mrb[0].mxu0 %v147
    %v315 = vpop.f32.mrb[0].mxu0
    %v316 = vadd.f32 %v122, %v315
    %v317 = vpop.f32.mrb[0].mxu0
    %v318 = vpop.f32.mrb[0].mxu0
    %v319 = vadd.f32 %v122, %v318
    %v320 = vpop.f32.mrb[0].mxu0
    %321 = vmatprep.mubr.bf16.mxu0 0
    %322 = vmatmul.mubr.bf16.gmra.mrb[0].mxu0 %v150
    %v323 = vpop.f32.mrb[0].mxu0
    %v324 = vadd.f32 %v122, %v323
    %v325 = vpop.f32.mrb[0].mxu0
    %v326 = vpop.f32.mrb[0].mxu0
    %v327 = vadd.f32 %v122, %v326
    %v328 = vpop.f32.mrb[0].mxu0
    %329 = vmatprep.mubr.bf16.mxu0 0
    %330 = vmatmul.mubr.bf16.gmra.mrb[0].mxu0 %v153
    %v331 = vpop.f32.mrb[0].mxu0
    %v332 = vadd.f32 %v122, %v331
    %v333 = vpop.f32.mrb[0].mxu0
    %v334 = vpop.f32.mrb[0].mxu0
    %v335 = vadd.f32 %v122, %v334
    %v336 = vpop.f32.mrb[0].mxu0
    %337 = vmatprep.mubr.bf16.mxu0 0
    %338 = vmatmul.mubr.bf16.gmra.mrb[0].mxu0 %v156
    %v339 = vpop.f32.mrb[0].mxu0
    %v340 = vadd.f32 %v122, %v339
    %v341 = vpop.f32.mrb[0].mxu0
    %v342 = vpop.f32.mrb[0].mxu0
    %v343 = vadd.f32 %v122, %v342
    %v344 = vpop.f32.mrb[0].mxu0
    %345 = vmatprep.mubr.bf16.mxu0 0
    %346 = vmatmul.mubr.bf16.gmra.mrb[0].mxu0 %v159
    %v347 = vpop.f32.mrb[0].mxu0
    %v348 = vadd.f32 %v122, %v347
    %v349 = vpop.f32.mrb[0].mxu0
    %v350 = vpop.f32.mrb[0].mxu0
    %v351 = vadd.f32 %v122, %v350
    %v352 = vpop.f32.mrb[0].mxu0
    %353 = vmatprep.mubr.bf16.mxu0 0
    %354 = vmatmul.mubr.bf16.gmra.mrb[0].mxu0 %v162
    %v355 = vpop.f32.mrb[0].mxu0
    %v356 = vadd.f32 %v122, %v355
    %v357 = vpop.f32.mrb[0].mxu0
    %v358 = vpop.f32.mrb[0].mxu0
    %v359 = vadd.f32 %v122, %v358
    %v360 = vpop.f32.mrb[0].mxu0
    %361 = vmatprep.mubr.bf16.mxu0 0
    %362 = vmatmul.mubr.bf16.gmra.mrb[0].mxu0 %v165
    %v363 = vpop.f32.mrb[0].mxu0
    %v364 = vadd.f32 %v122, %v363
    %v365 = vpop.f32.mrb[0].mxu0
    %v366 = vpop.f32.mrb[0].mxu0
    %v367 = vadd.f32 %v122, %v366
    %v368 = vpop.f32.mrb[0].mxu0
    %369 = vmatprep.mubr.bf16.mxu0 0
    %370 = vmatmul.mubr.bf16.gmra.mrb[0].mxu0 %v168
    %v371 = vpop.f32.mrb[0].mxu0
    %v372 = vadd.f32 %v122, %v371
    %v373 = vpop.f32.mrb[0].mxu0
    %v374 = vpop.f32.mrb[0].mxu0
    %v375 = vadd.f32 %v122, %v374
    %v376 = vpop.f32.mrb[0].mxu0
    %377 = vmatprep.mubr.bf16.mxu0 0
    %378 = vmatmul.mubr.bf16.gmra.mrb[0].mxu0 %v171
    %v379 = vpop.f32.mrb[0].mxu0
    %v380 = vadd.f32 %v122, %v379
    %v381 = vpop.f32.mrb[0].mxu0
    %v382 = vpop.f32.mrb[0].mxu0
    %v383 = vadd.f32 %v122, %v382
    %v384 = vpop.f32.mrb[0].mxu0
    %385 = vmatprep.mubr.bf16.mxu0 0
    %386 = vmatmul.mubr.bf16.gmra.mrb[0].mxu0 %v174
    %v387 = vpop.f32.mrb[0].mxu0
    %v388 = vadd.f32 %v122, %v387
    %v389 = vpop.f32.mrb[0].mxu0
    %v390 = vpop.f32.mrb[0].mxu0
    %v391 = vadd.f32 %v122, %v390
    %v392 = vpop.f32.mrb[0].mxu0
    %393 = vmatprep.mubr.bf16.mxu0 0
    %394 = vmatmul.mubr.bf16.gmra.mrb[0].mxu0 %v177
    %v395 = vpop.f32.mrb[0].mxu0
    %v396 = vadd.f32 %v122, %v395
    %v397 = vpop.f32.mrb[0].mxu0
    %v398 = vpop.f32.mrb[0].mxu0
    %v399 = vadd.f32 %v122, %v398
    %v400 = vpop.f32.mrb[0].mxu0
    %401 = vmatprep.mubr.bf16.mxu0 0
    %402 = vmatmul.mubr.bf16.gmra.mrb[0].mxu0 %v180
    %v403 = vpop.f32.mrb[0].mxu0
    %v404 = vadd.f32 %v122, %v403
    %v405 = vpop.f32.mrb[0].mxu0
    %v406 = vpop.f32.mrb[0].mxu0
    %v407 = vadd.f32 %v122, %v406
    %v408 = vpop.f32.mrb[0].mxu0
    %409 = vmatprep.mubr.bf16.mxu0 0
    %410 = vmatmul.mubr.bf16.gmra.mrb[0].mxu0 %v183
    %v411 = vpop.f32.mrb[0].mxu0
    %v412 = vadd.f32 %v122, %v411
    %v413 = vpop.f32.mrb[0].mxu0
    %v414 = vpop.f32.mrb[0].mxu0
    %v415 = vadd.f32 %v122, %v414
    %v416 = vpop.f32.mrb[0].mxu0
    %417 = vmatprep.mubr.bf16.mxu0 0
    %418 = vmatmul.mubr.bf16.gmra.mrb[0].mxu0 %v186
    %v419 = vpop.f32.mrb[0].mxu0
    %v420 = vadd.f32 %v122, %v419
    %v421 = vpop.f32.mrb[0].mxu0
    %v422 = vpop.f32.mrb[0].mxu0
    %v423 = vadd.f32 %v122, %v422
    %v424 = vpop.f32.mrb[0].mxu0
    %425 = vmatprep.mubr.bf16.mxu0 0
    %426 = vmatmul.mubr.bf16.gmra.mrb[0].mxu0 %v189
    %v427 = vpop.f32.mrb[0].mxu0
    %v428 = vadd.f32 %v122, %v427
    %v429 = vpop.f32.mrb[0].mxu0
    %v430 = vpop.f32.mrb[0].mxu0
    %v431 = vadd.f32 %v122, %v430
    %v432 = vpop.f32.mrb[0].mxu0
    %433 = vmatprep.mubr.bf16.mxu0 0
    %434 = vmatmul.mubr.bf16.gmra.mrb[0].mxu0 %v192
    %v435 = vpop.f32.mrb[0].mxu0
    %v436 = vadd.f32 %v122, %v435
    %v437 = vpop.f32.mrb[0].mxu0
    %v438 = vpop.f32.mrb[0].mxu0
    %v439 = vadd.f32 %v122, %v438
    %v440 = vpop.f32.mrb[0].mxu0
    %441 = vmatprep.mubr.bf16.mxu0 0
    %442 = vmatmul.mubr.bf16.gmra.mrb[0].mxu0 %v195
    %v443 = vpop.f32.mrb[0].mxu0
    %v444 = vadd.f32 %v122, %v443
    %v445 = vpop.f32.mrb[0].mxu0
    %v446 = vpop.f32.mrb[0].mxu0
    %v447 = vadd.f32 %v122, %v446
    %v448 = vpop.f32.mrb[0].mxu0
    %449 = vmatprep.mubr.bf16.mxu0 0
    %450 = vmatmul.mubr.bf16.gmra.mrb[0].mxu0 %v198
    %v451 = vpop.f32.mrb[0].mxu0
    %v452 = vadd.f32 %v122, %v451
    %v453 = vpop.f32.mrb[0].mxu0
    %v454 = vpop.f32.mrb[0].mxu0
    %v455 = vadd.f32 %v122, %v454
    %v456 = vpop.f32.mrb[0].mxu0
    %457 = vmatprep.mubr.bf16.mxu0 0
    %458 = vmatmul.mubr.bf16.gmra.mrb[0].mxu0 %v201
    %v459 = vpop.f32.mrb[0].mxu0
    %v460 = vadd.f32 %v122, %v459
    %v461 = vpop.f32.mrb[0].mxu0
    %v462 = vpop.f32.mrb[0].mxu0
    %v463 = vadd.f32 %v122, %v462
    %v464 = vpop.f32.mrb[0].mxu0
    %465 = vmatprep.mubr.bf16.mxu0 0
    %466 = vmatmul.mubr.bf16.gmra.mrb[0].mxu0 %v204
    %v467 = vpop.f32.mrb[0].mxu0
    %v468 = vadd.f32 %v122, %v467
    %v469 = vpop.f32.mrb[0].mxu0
    %v470 = vpop.f32.mrb[0].mxu0
    %v471 = vadd.f32 %v122, %v470
    %v472 = vpop.f32.mrb[0].mxu0
    %473 = vmatprep.mubr.bf16.mxu0 0
    %474 = vmatmul.mubr.bf16.gmra.mrb[0].mxu0 %v207
    %v475 = vpop.f32.mrb[0].mxu0
    %v476 = vadd.f32 %v122, %v475
    %v477 = vpop.f32.mrb[0].mxu0
    %v478 = vpop.f32.mrb[0].mxu0
    %v479 = vadd.f32 %v122, %v478
    %v480 = vpop.f32.mrb[0].mxu0
    %481 = vmatprep.mubr.bf16.mxu0 0
    %482 = vmatmul.mubr.bf16.gmra.mrb[0].mxu0 %v210
    %v483 = vpop.f32.mrb[0].mxu0
    %v484 = vadd.f32 %v122, %v483
    %v485 = vpop.f32.mrb[0].mxu0
    %v486 = vpop.f32.mrb[0].mxu0
    %v487 = vadd.f32 %v122, %v486
    %v488 = vpop.f32.mrb[0].mxu0
    %489 = vmatprep.mubr.bf16.mxu0 0
    %490 = vmatmul.mubr.bf16.gmra.mrb[0].mxu0 %v213
    %v491 = vpop.f32.mrb[0].mxu0
    %v492 = vadd.f32 %v122, %v491
    %v493 = vpop.f32.mrb[0].mxu0
    %v494 = vpop.f32.mrb[0].mxu0
    %v495 = vadd.f32 %v122, %v494
    %v496 = vpop.f32.mrb[0].mxu0
    %497 = vmatprep.mubr.bf16.mxu0 0
    %498 = vmatmul.mubr.bf16.gmra.mrb[0].mxu0 %v216
    %v499 = vpop.f32.mrb[0].mxu0
    %v500 = vadd.f32 %v122, %v499
    %v501 = vpop.f32.mrb[0].mxu0
    %v502 = vpop.f32.mrb[0].mxu0
    %v503 = vadd.f32 %v122, %v502
    %v504 = vpop.f32.mrb[0].mxu0
    %505 = vmatprep.mubr.bf16.mxu0 0
    %506 = vmatmul.mubr.bf16.gmra.mrb[0].mxu0 %v219
    %v507 = vpop.f32.mrb[0].mxu0
    %v508 = vadd.f32 %v122, %v507
    %v509 = vpop.f32.mrb[0].mxu0
    %v510 = vpop.f32.mrb[0].mxu0
    %v511 = vadd.f32 %v122, %v510
    %v512 = vpop.f32.mrb[0].mxu0
    %513 = vdwg.mxu0
    %v514 = vpack.c.bf16 %v263, %v260
    %v515 = vpack.c.bf16 %v271, %v268
    %v516 = vpack.c.bf16 %v279, %v276
    %v517 = vpack.c.bf16 %v287, %v284
    %v518 = vpack.c.bf16 %v295, %v292
    %v519 = vpack.c.bf16 %v303, %v300
    %v520 = vpack.c.bf16 %v311, %v308
    %v521 = vpack.c.bf16 %v319, %v316
    %v522 = vpack.c.bf16 %v327, %v324
    %v523 = vpack.c.bf16 %v335, %v332
    %v524 = vpack.c.bf16 %v343, %v340
    %v525 = vpack.c.bf16 %v351, %v348
    %v526 = vpack.c.bf16 %v359, %v356
    %v527 = vpack.c.bf16 %v367, %v364
    %v528 = vpack.c.bf16 %v375, %v372
    %v529 = vpack.c.bf16 %v383, %v380
    %v530 = vpack.c.bf16 %v391, %v388
    %v531 = vpack.c.bf16 %v399, %v396
    %v532 = vpack.c.bf16 %v407, %v404
    %v533 = vpack.c.bf16 %v415, %v412
    %v534 = vpack.c.bf16 %v423, %v420
    %v535 = vpack.c.bf16 %v431, %v428
    %v536 = vpack.c.bf16 %v439, %v436
    %v537 = vpack.c.bf16 %v447, %v444
    %v538 = vpack.c.bf16 %v455, %v452
    %v539 = vpack.c.bf16 %v463, %v460
    %v540 = vpack.c.bf16 %v471, %v468
    %v541 = vpack.c.bf16 %v479, %v476
    %v542 = vpack.c.bf16 %v487, %v484
    %v543 = vpack.c.bf16 %v495, %v492
    %v544 = vpack.c.bf16 %v503, %v500
    %v545 = vpack.c.bf16 %v511, %v508
    %v578 = vunpack.c.l.b16 %v514
    %v579 = vunpack.c.h.b16 %v514
    %v580 = vunpack.c.l.b16 %v515
    %v581 = vunpack.c.h.b16 %v515
    %v582 = vunpack.c.l.b16 %v516
    %v583 = vunpack.c.h.b16 %v516
    %v584 = vunpack.c.l.b16 %v517
    %v585 = vunpack.c.h.b16 %v517
    %v586 = vunpack.c.l.b16 %v518
    %v587 = vunpack.c.h.b16 %v518
    %v588 = vunpack.c.l.b16 %v519
    %v589 = vunpack.c.h.b16 %v519
    %v590 = vunpack.c.l.b16 %v520
    %v591 = vunpack.c.h.b16 %v520
    %v592 = vunpack.c.l.b16 %v521
    %v593 = vunpack.c.h.b16 %v521
    %v594 = vunpack.c.l.b16 %v522
    %v595 = vunpack.c.h.b16 %v522
    %v596 = vunpack.c.l.b16 %v523
    %v597 = vunpack.c.h.b16 %v523
    %v598 = vunpack.c.l.b16 %v524
    %v599 = vunpack.c.h.b16 %v524
    %v600 = vunpack.c.l.b16 %v525
    %v601 = vunpack.c.h.b16 %v525
    %v602 = vunpack.c.l.b16 %v526
    %v603 = vunpack.c.h.b16 %v526
    %v604 = vunpack.c.l.b16 %v527
    %v605 = vunpack.c.h.b16 %v527
    %v606 = vunpack.c.l.b16 %v528
    %v607 = vunpack.c.h.b16 %v528
    %v608 = vunpack.c.l.b16 %v529
    %v609 = vunpack.c.h.b16 %v529
    %v610 = vunpack.c.l.b16 %v530
    %v611 = vunpack.c.h.b16 %v530
    %v612 = vunpack.c.l.b16 %v531
    %v613 = vunpack.c.h.b16 %v531
    %v614 = vunpack.c.l.b16 %v532
    %v615 = vunpack.c.h.b16 %v532
    %v616 = vunpack.c.l.b16 %v533
    %v617 = vunpack.c.h.b16 %v533
    %v618 = vunpack.c.l.b16 %v534
    %v619 = vunpack.c.h.b16 %v534
    %v620 = vunpack.c.l.b16 %v535
    %v621 = vunpack.c.h.b16 %v535
    %v622 = vunpack.c.l.b16 %v536
    %v623 = vunpack.c.h.b16 %v536
    %v624 = vunpack.c.l.b16 %v537
    %v625 = vunpack.c.h.b16 %v537
    %v626 = vunpack.c.l.b16 %v538
    %v627 = vunpack.c.h.b16 %v538
    %v628 = vunpack.c.l.b16 %v539
    %v629 = vunpack.c.h.b16 %v539
    %v630 = vunpack.c.l.b16 %v540
    %v631 = vunpack.c.h.b16 %v540
    %v632 = vunpack.c.l.b16 %v541
    %v633 = vunpack.c.h.b16 %v541
    %v634 = vunpack.c.l.b16 %v542
    %v635 = vunpack.c.h.b16 %v542
    %v636 = vunpack.c.l.b16 %v543
    %v637 = vunpack.c.h.b16 %v543
    %v638 = vunpack.c.l.b16 %v544
    %v639 = vunpack.c.h.b16 %v544
    %v640 = vunpack.c.l.b16 %v545
    %v641 = vunpack.c.h.b16 %v545
    %v642 = vpack.c.b16 %v578, %v578
    %v643 = vpack.c.b16 %v579, %v579
    %v644 = vpack.c.b16 %v580, %v580
    %v645 = vpack.c.b16 %v581, %v581
    %v646 = vpack.c.b16 %v582, %v582
    %v647 = vpack.c.b16 %v583, %v583
    %v648 = vpack.c.b16 %v584, %v584
    %v649 = vpack.c.b16 %v585, %v585
    %v650 = vpack.c.b16 %v586, %v586
    %v651 = vpack.c.b16 %v587, %v587
    %v652 = vpack.c.b16 %v588, %v588
    %v653 = vpack.c.b16 %v589, %v589
    %v654 = vpack.c.b16 %v590, %v590
    %v655 = vpack.c.b16 %v591, %v591
    %v656 = vpack.c.b16 %v592, %v592
    %v657 = vpack.c.b16 %v593, %v593
    %v658 = vpack.c.b16 %v594, %v594
    %v659 = vpack.c.b16 %v595, %v595
    %v660 = vpack.c.b16 %v596, %v596
    %v661 = vpack.c.b16 %v597, %v597
    %v662 = vpack.c.b16 %v598, %v598
    %v663 = vpack.c.b16 %v599, %v599
    %v664 = vpack.c.b16 %v600, %v600
    %v665 = vpack.c.b16 %v601, %v601
    %v666 = vpack.c.b16 %v602, %v602
    %v667 = vpack.c.b16 %v603, %v603
    %v668 = vpack.c.b16 %v604, %v604
    %v669 = vpack.c.b16 %v605, %v605
    %v670 = vpack.c.b16 %v606, %v606
    %v671 = vpack.c.b16 %v607, %v607
    %v672 = vpack.c.b16 %v608, %v608
    %v673 = vpack.c.b16 %v609, %v609
    %v674 = vpack.c.b16 %v610, %v610
    %v675 = vpack.c.b16 %v611, %v611
    %v676 = vpack.c.b16 %v612, %v612
    %v677 = vpack.c.b16 %v613, %v613
    %v678 = vpack.c.b16 %v614, %v614
    %v679 = vpack.c.b16 %v615, %v615
    %v680 = vpack.c.b16 %v616, %v616
    %v681 = vpack.c.b16 %v617, %v617
    %v682 = vpack.c.b16 %v618, %v618
    %v683 = vpack.c.b16 %v619, %v619
    %v684 = vpack.c.b16 %v620, %v620
    %v685 = vpack.c.b16 %v621, %v621
    %v686 = vpack.c.b16 %v622, %v622
    %v687 = vpack.c.b16 %v623, %v623
    %v688 = vpack.c.b16 %v624, %v624
    %v689 = vpack.c.b16 %v625, %v625
    %v690 = vpack.c.b16 %v626, %v626
    %v691 = vpack.c.b16 %v627, %v627
    %v692 = vpack.c.b16 %v628, %v628
    %v693 = vpack.c.b16 %v629, %v629
    %v694 = vpack.c.b16 %v630, %v630
    %v695 = vpack.c.b16 %v631, %v631
    %v696 = vpack.c.b16 %v632, %v632
    %v697 = vpack.c.b16 %v633, %v633
    %v698 = vpack.c.b16 %v634, %v634
    %v699 = vpack.c.b16 %v635, %v635
    %v700 = vpack.c.b16 %v636, %v636
    %v701 = vpack.c.b16 %v637, %v637
    %v702 = vpack.c.b16 %v638, %v638
    %v703 = vpack.c.b16 %v639, %v639
    %v704 = vpack.c.b16 %v640, %v640
    %v705 = vpack.c.b16 %v641, %v641
    %770 = vst [vmem:[#allocation2] sm:$0xf] %v642
    %771 = vst [vmem:[#allocation2 + $0x4] sm:$0xf] %v643
    %772 = vst [vmem:[#allocation2 + $0x8] sm:$0xf] %v644
    %773 = vst [vmem:[#allocation2 + $0xc] sm:$0xf] %v645
    %774 = vst [vmem:[#allocation2 + $0x10] sm:$0xf] %v646
    %775 = vst [vmem:[#allocation2 + $0x14] sm:$0xf] %v647
    %776 = vst [vmem:[#allocation2 + $0x18] sm:$0xf] %v648
    %777 = vst [vmem:[#allocation2 + $0x1c] sm:$0xf] %v649
    %778 = vst [vmem:[#allocation2 + $0x20] sm:$0xf] %v650
    %779 = vst [vmem:[#allocation2 + $0x24] sm:$0xf] %v651
    %780 = vst [vmem:[#allocation2 + $0x28] sm:$0xf] %v652
    %781 = vst [vmem:[#allocation2 + $0x2c] sm:$0xf] %v653
    %782 = vst [vmem:[#allocation2 + $0x30] sm:$0xf] %v654
    %783 = vst [vmem:[#allocation2 + $0x34] sm:$0xf] %v655
    %784 = vst [vmem:[#allocation2 + $0x38] sm:$0xf] %v656
    %785 = vst [vmem:[#allocation2 + $0x3c] sm:$0xf] %v657
    %786 = vst [vmem:[#allocation2 + $0x40] sm:$0xf] %v658
    %787 = vst [vmem:[#allocation2 + $0x44] sm:$0xf] %v659
    %788 = vst [vmem:[#allocation2 + $0x48] sm:$0xf] %v660
    %789 = vst [vmem:[#allocation2 + $0x4c] sm:$0xf] %v661
    %790 = vst [vmem:[#allocation2 + $0x50] sm:$0xf] %v662
    %791 = vst [vmem:[#allocation2 + $0x54] sm:$0xf] %v663
    %792 = vst [vmem:[#allocation2 + $0x58] sm:$0xf] %v664
    %793 = vst [vmem:[#allocation2 + $0x5c] sm:$0xf] %v665
    %794 = vst [vmem:[#allocation2 + $0x60] sm:$0xf] %v666
    %795 = vst [vmem:[#allocation2 + $0x64] sm:$0xf] %v667
    %796 = vst [vmem:[#allocation2 + $0x68] sm:$0xf] %v668
    %797 = vst [vmem:[#allocation2 + $0x6c] sm:$0xf] %v669
    %798 = vst [vmem:[#allocation2 + $0x70] sm:$0xf] %v670
    %799 = vst [vmem:[#allocation2 + $0x74] sm:$0xf] %v671
    %800 = vst [vmem:[#allocation2 + $0x78] sm:$0xf] %v672
    %801 = vst [vmem:[#allocation2 + $0x7c] sm:$0xf] %v673
    %802 = vst [vmem:[#allocation2 + $0x80] sm:$0xf] %v674
    %803 = vst [vmem:[#allocation2 + $0x84] sm:$0xf] %v675
    %804 = vst [vmem:[#allocation2 + $0x88] sm:$0xf] %v676
    %805 = vst [vmem:[#allocation2 + $0x8c] sm:$0xf] %v677
    %806 = vst [vmem:[#allocation2 + $0x90] sm:$0xf] %v678
    %807 = vst [vmem:[#allocation2 + $0x94] sm:$0xf] %v679
    %808 = vst [vmem:[#allocation2 + $0x98] sm:$0xf] %v680
    %809 = vst [vmem:[#allocation2 + $0x9c] sm:$0xf] %v681
    %810 = vst [vmem:[#allocation2 + $0xa0] sm:$0xf] %v682
    %811 = vst [vmem:[#allocation2 + $0xa4] sm:$0xf] %v683
    %812 = vst [vmem:[#allocation2 + $0xa8] sm:$0xf] %v684
    %813 = vst [vmem:[#allocation2 + $0xac] sm:$0xf] %v685
    %814 = vst [vmem:[#allocation2 + $0xb0] sm:$0xf] %v686
    %815 = vst [vmem:[#allocation2 + $0xb4] sm:$0xf] %v687
    %816 = vst [vmem:[#allocation2 + $0xb8] sm:$0xf] %v688
    %817 = vst [vmem:[#allocation2 + $0xbc] sm:$0xf] %v689
    %818 = vst [vmem:[#allocation2 + $0xc0] sm:$0xf] %v690
    %819 = vst [vmem:[#allocation2 + $0xc4] sm:$0xf] %v691
    %820 = vst [vmem:[#allocation2 + $0xc8] sm:$0xf] %v692
    %821 = vst [vmem:[#allocation2 + $0xcc] sm:$0xf] %v693
    %822 = vst [vmem:[#allocation2 + $0xd0] sm:$0xf] %v694
    %823 = vst [vmem:[#allocation2 + $0xd4] sm:$0xf] %v695
    %824 = vst [vmem:[#allocation2 + $0xd8] sm:$0xf] %v696
    %825 = vst [vmem:[#allocation2 + $0xdc] sm:$0xf] %v697
    %826 = vst [vmem:[#allocation2 + $0xe0] sm:$0xf] %v698
    %827 = vst [vmem:[#allocation2 + $0xe4] sm:$0xf] %v699
    %828 = vst [vmem:[#allocation2 + $0xe8] sm:$0xf] %v700
    %829 = vst [vmem:[#allocation2 + $0xec] sm:$0xf] %v701
    %830 = vst [vmem:[#allocation2 + $0xf0] sm:$0xf] %v702
    %831 = vst [vmem:[#allocation2 + $0xf4] sm:$0xf] %v703
    %832 = vst [vmem:[#allocation2 + $0xf8] sm:$0xf] %v704
    %833 = vst [vmem:[#allocation2 + $0xfc] sm:$0xf] %v705
    %v834 = vlaneseq
    %v835 = vshrl.u32 %v834, 7
    %v836 = vadd.s32 %v835, 8
    %v837 = vadd.s32 %v835, 16
    %v838 = vadd.s32 %v835, 24
    %v839 = vadd.s32 %v835, 32
    %v840 = vadd.s32 %v835, 40
    %v841 = vadd.s32 %v835, 48
    %v842 = vadd.s32 %v835, 56
    %v843 = vadd.s32 %v835, 64
    %v844 = vadd.s32 %v835, 72
    %v845 = vadd.s32 %v835, 80
    %v846 = vadd.s32 %v835, 88
    %v847 = vadd.s32 %v835, 96
    %v848 = vadd.s32 %v835, 104
    %v849 = vadd.s32 %v835, 112
    %v850 = vadd.s32 %v835, 120
    %v851 = vadd.s32 %v835, 128
    %v852 = vadd.s32 %v835, 136
    %v853 = vadd.s32 %v835, 144
    %v854 = vadd.s32 %v835, 152
    %v855 = vadd.s32 %v835, 160
    %v856 = vadd.s32 %v835, 168
    %v857 = vadd.s32 %v835, 176
    %v858 = vadd.s32 %v835, 184
    %v859 = vadd.s32 %v835, 192
    %v860 = vadd.s32 %v835, 200
    %v861 = vadd.s32 %v835, 208
    %v862 = vadd.s32 %v835, 216
    %v863 = vadd.s32 %v835, 224
    %v864 = vadd.s32 %v835, 232
    %v865 = vadd.s32 %v835, 240
    %v866 = vadd.s32 %v835, 248
    %v867 = vadd.s32 %v835, 256
    %v868 = vadd.s32 %v835, 264
    %v869 = vadd.s32 %v835, 272
    %v870 = vadd.s32 %v835, 280
    %v871 = vadd.s32 %v835, 288
    %v872 = vadd.s32 %v835, 296
    %v873 = vadd.s32 %v835, 304
    %v874 = vadd.s32 %v835, 312
    %v875 = vadd.s32 %v835, 320
    %v876 = vadd.s32 %v835, 328
    %v877 = vadd.s32 %v835, 336
    %v878 = vadd.s32 %v835, 344
    %v879 = vadd.s32 %v835, 352
    %v880 = vadd.s32 %v835, 360
    %v881 = vadd.s32 %v835, 368
    %v882 = vadd.s32 %v835, 376
    %v883 = vadd.s32 %v835, 384
    %v884 = vadd.s32 %v835, 392
    %v885 = vadd.s32 %v835, 400
    %v886 = vadd.s32 %v835, 408
    %v887 = vadd.s32 %v835, 416
    %v888 = vadd.s32 %v835, 424
    %v889 = vadd.s32 %v835, 432
    %v890 = vadd.s32 %v835, 440
    %v891 = vadd.s32 %v835, 448
    %v892 = vadd.s32 %v835, 456
    %v893 = vadd.s32 %v835, 464
    %v894 = vadd.s32 %v835, 472
    %v895 = vadd.s32 %v835, 480
    %v896 = vadd.s32 %v835, 488
    %v897 = vadd.s32 %v835, 496
    %v898 = vadd.s32 %v835, 504
    %s899 = smul.u32 0, 512
    %v900 = vstv %s899
    %v901 = vadd.s32 %v835, %v900
    %v902 = vadd.s32 %v836, %v900
    %v903 = vadd.s32 %v837, %v900
    %v904 = vadd.s32 %v838, %v900
    %v905 = vadd.s32 %v839, %v900
    %v906 = vadd.s32 %v840, %v900
    %v907 = vadd.s32 %v841, %v900
    %v908 = vadd.s32 %v842, %v900
    %v909 = vadd.s32 %v843, %v900
    %v910 = vadd.s32 %v844, %v900
    %v911 = vadd.s32 %v845, %v900
    %v912 = vadd.s32 %v846, %v900
    %v913 = vadd.s32 %v847, %v900
    %v914 = vadd.s32 %v848, %v900
    %v915 = vadd.s32 %v849, %v900
    %v916 = vadd.s32 %v850, %v900
    %v917 = vadd.s32 %v851, %v900
    %v918 = vadd.s32 %v852, %v900
    %v919 = vadd.s32 %v853, %v900
    %v920 = vadd.s32 %v854, %v900
    %v921 = vadd.s32 %v855, %v900
    %v922 = vadd.s32 %v856, %v900
    %v923 = vadd.s32 %v857, %v900
    %v924 = vadd.s32 %v858, %v900
    %v925 = vadd.s32 %v859, %v900
    %v926 = vadd.s32 %v860, %v900
    %v927 = vadd.s32 %v861, %v900
    %v928 = vadd.s32 %v862, %v900
    %v929 = vadd.s32 %v863, %v900
    %v930 = vadd.s32 %v864, %v900
    %v931 = vadd.s32 %v865, %v900
    %v932 = vadd.s32 %v866, %v900
    %v933 = vadd.s32 %v867, %v900
    %v934 = vadd.s32 %v868, %v900
    %v935 = vadd.s32 %v869, %v900
    %v936 = vadd.s32 %v870, %v900
    %v937 = vadd.s32 %v871, %v900
    %v938 = vadd.s32 %v872, %v900
    %v939 = vadd.s32 %v873, %v900
    %v940 = vadd.s32 %v874, %v900
    %v941 = vadd.s32 %v875, %v900
    %v942 = vadd.s32 %v876, %v900
    %v943 = vadd.s32 %v877, %v900
    %v944 = vadd.s32 %v878, %v900
    %v945 = vadd.s32 %v879, %v900
    %v946 = vadd.s32 %v880, %v900
    %v947 = vadd.s32 %v881, %v900
    %v948 = vadd.s32 %v882, %v900
    %v949 = vadd.s32 %v883, %v900
    %v950 = vadd.s32 %v884, %v900
    %v951 = vadd.s32 %v885, %v900
    %v952 = vadd.s32 %v886, %v900
    %v953 = vadd.s32 %v887, %v900
    %v954 = vadd.s32 %v888, %v900
    %v955 = vadd.s32 %v889, %v900
    %v956 = vadd.s32 %v890, %v900
    %v957 = vadd.s32 %v891, %v900
    %v958 = vadd.s32 %v892, %v900
    %v959 = vadd.s32 %v893, %v900
    %v960 = vadd.s32 %v894, %v900
    %v961 = vadd.s32 %v895, %v900
    %v962 = vadd.s32 %v896, %v900
    %v963 = vadd.s32 %v897, %v900
    %v964 = vadd.s32 %v898, %v900
    %vm965 = vcmp.lt.s32.totalorder %v901, 512
    %vm966 = vcmp.lt.s32.totalorder %v902, 512
    %vm967 = vcmp.lt.s32.totalorder %v903, 512
    %vm968 = vcmp.lt.s32.totalorder %v904, 512
    %vm969 = vcmp.lt.s32.totalorder %v905, 512
    %vm970 = vcmp.lt.s32.totalorder %v906, 512
    %vm971 = vcmp.lt.s32.totalorder %v907, 512
    %vm972 = vcmp.lt.s32.totalorder %v908, 512
    %vm973 = vcmp.lt.s32.totalorder %v909, 512
    %vm974 = vcmp.lt.s32.totalorder %v910, 512
    %vm975 = vcmp.lt.s32.totalorder %v911, 512
    %vm976 = vcmp.lt.s32.totalorder %v912, 512
    %vm977 = vcmp.lt.s32.totalorder %v913, 512
    %vm978 = vcmp.lt.s32.totalorder %v914, 512
    %vm979 = vcmp.lt.s32.totalorder %v915, 512
    %vm980 = vcmp.lt.s32.totalorder %v916, 512
    %vm981 = vcmp.lt.s32.totalorder %v917, 512
    %vm982 = vcmp.lt.s32.totalorder %v918, 512
    %vm983 = vcmp.lt.s32.totalorder %v919, 512
    %vm984 = vcmp.lt.s32.totalorder %v920, 512
    %vm985 = vcmp.lt.s32.totalorder %v921, 512
    %vm986 = vcmp.lt.s32.totalorder %v922, 512
    %vm987 = vcmp.lt.s32.totalorder %v923, 512
    %vm988 = vcmp.lt.s32.totalorder %v924, 512
    %vm989 = vcmp.lt.s32.totalorder %v925, 512
    %vm990 = vcmp.lt.s32.totalorder %v926, 512
    %vm991 = vcmp.lt.s32.totalorder %v927, 512
    %vm992 = vcmp.lt.s32.totalorder %v928, 512
    %vm993 = vcmp.lt.s32.totalorder %v929, 512
    %vm994 = vcmp.lt.s32.totalorder %v930, 512
    %vm995 = vcmp.lt.s32.totalorder %v931, 512
    %vm996 = vcmp.lt.s32.totalorder %v932, 512
    %vm997 = vcmp.lt.s32.totalorder %v933, 512
    %vm998 = vcmp.lt.s32.totalorder %v934, 512
    %vm999 = vcmp.lt.s32.totalorder %v935, 512
    %vm1000 = vcmp.lt.s32.totalorder %v936, 512
    %vm1001 = vcmp.lt.s32.totalorder %v937, 512
    %vm1002 = vcmp.lt.s32.totalorder %v938, 512
    %vm1003 = vcmp.lt.s32.totalorder %v939, 512
    %vm1004 = vcmp.lt.s32.totalorder %v940, 512
    %vm1005 = vcmp.lt.s32.totalorder %v941, 512
    %vm1006 = vcmp.lt.s32.totalorder %v942, 512
    %vm1007 = vcmp.lt.s32.totalorder %v943, 512
    %vm1008 = vcmp.lt.s32.totalorder %v944, 512
    %vm1009 = vcmp.lt.s32.totalorder %v945, 512
    %vm1010 = vcmp.lt.s32.totalorder %v946, 512
    %vm1011 = vcmp.lt.s32.totalorder %v947, 512
    %vm1012 = vcmp.lt.s32.totalorder %v948, 512
    %vm1013 = vcmp.lt.s32.totalorder %v949, 512
    %vm1014 = vcmp.lt.s32.totalorder %v950, 512
    %vm1015 = vcmp.lt.s32.totalorder %v951, 512
    %vm1016 = vcmp.lt.s32.totalorder %v952, 512
    %vm1017 = vcmp.lt.s32.totalorder %v953, 512
    %vm1018 = vcmp.lt.s32.totalorder %v954, 512
    %vm1019 = vcmp.lt.s32.totalorder %v955, 512
    %vm1020 = vcmp.lt.s32.totalorder %v956, 512
    %vm1021 = vcmp.lt.s32.totalorder %v957, 512
    %vm1022 = vcmp.lt.s32.totalorder %v958, 512
    %vm1023 = vcmp.lt.s32.totalorder %v959, 512
    %vm1024 = vcmp.lt.s32.totalorder %v960, 512
    %vm1025 = vcmp.lt.s32.totalorder %v961, 512
    %vm1026 = vcmp.lt.s32.totalorder %v962, 512
    %vm1027 = vcmp.lt.s32.totalorder %v963, 512
    %vm1028 = vcmp.lt.s32.totalorder %v964, 512
    %v1029 = vsel %vm965, 1, 0
    %v1030 = vsel %vm966, 1, 0
    %v1031 = vsel %vm967, 1, 0
    %v1032 = vsel %vm968, 1, 0
    %v1033 = vsel %vm969, 1, 0
    %v1034 = vsel %vm970, 1, 0
    %v1035 = vsel %vm971, 1, 0
    %v1036 = vsel %vm972, 1, 0
    %v1037 = vsel %vm973, 1, 0
    %v1038 = vsel %vm974, 1, 0
    %v1039 = vsel %vm975, 1, 0
    %v1040 = vsel %vm976, 1, 0
    %v1041 = vsel %vm977, 1, 0
    %v1042 = vsel %vm978, 1, 0
    %v1043 = vsel %vm979, 1, 0
    %v1044 = vsel %vm980, 1, 0
    %v1045 = vsel %vm981, 1, 0
    %v1046 = vsel %vm982, 1, 0
    %v1047 = vsel %vm983, 1, 0
    %v1048 = vsel %vm984, 1, 0
    %v1049 = vsel %vm985, 1, 0
    %v1050 = vsel %vm986, 1, 0
    %v1051 = vsel %vm987, 1, 0
    %v1052 = vsel %vm988, 1, 0
    %v1053 = vsel %vm989, 1, 0
    %v1054 = vsel %vm990, 1, 0
    %v1055 = vsel %vm991, 1, 0
    %v1056 = vsel %vm992, 1, 0
    %v1057 = vsel %vm993, 1, 0
    %v1058 = vsel %vm994, 1, 0
    %v1059 = vsel %vm995, 1, 0
    %v1060 = vsel %vm996, 1, 0
    %v1061 = vsel %vm997, 1, 0
    %v1062 = vsel %vm998, 1, 0
    %v1063 = vsel %vm999, 1, 0
    %v1064 = vsel %vm1000, 1, 0
    %v1065 = vsel %vm1001, 1, 0
    %v1066 = vsel %vm1002, 1, 0
    %v1067 = vsel %vm1003, 1, 0
    %v1068 = vsel %vm1004, 1, 0
    %v1069 = vsel %vm1005, 1, 0
    %v1070 = vsel %vm1006, 1, 0
    %v1071 = vsel %vm1007, 1, 0
    %v1072 = vsel %vm1008, 1, 0
    %v1073 = vsel %vm1009, 1, 0
    %v1074 = vsel %vm1010, 1, 0
    %v1075 = vsel %vm1011, 1, 0
    %v1076 = vsel %vm1012, 1, 0
    %v1077 = vsel %vm1013, 1, 0
    %v1078 = vsel %vm1014, 1, 0
    %v1079 = vsel %vm1015, 1, 0
    %v1080 = vsel %vm1016, 1, 0
    %v1081 = vsel %vm1017, 1, 0
    %v1082 = vsel %vm1018, 1, 0
    %v1083 = vsel %vm1019, 1, 0
    %v1084 = vsel %vm1020, 1, 0
    %v1085 = vsel %vm1021, 1, 0
    %v1086 = vsel %vm1022, 1, 0
    %v1087 = vsel %vm1023, 1, 0
    %v1088 = vsel %vm1024, 1, 0
    %v1089 = vsel %vm1025, 1, 0
    %v1090 = vsel %vm1026, 1, 0
    %v1091 = vsel %vm1027, 1, 0
    %v1092 = vsel %vm1028, 1, 0
    %vm1093 = vcmp.eq.s32.totalorder %v1029, 1
    %vm1094 = vcmp.eq.s32.totalorder %v1030, 1
    %vm1095 = vcmp.eq.s32.totalorder %v1031, 1
    %vm1096 = vcmp.eq.s32.totalorder %v1032, 1
    %vm1097 = vcmp.eq.s32.totalorder %v1033, 1
    %vm1098 = vcmp.eq.s32.totalorder %v1034, 1
    %vm1099 = vcmp.eq.s32.totalorder %v1035, 1
    %vm1100 = vcmp.eq.s32.totalorder %v1036, 1
    %vm1101 = vcmp.eq.s32.totalorder %v1037, 1
    %vm1102 = vcmp.eq.s32.totalorder %v1038, 1
    %vm1103 = vcmp.eq.s32.totalorder %v1039, 1
    %vm1104 = vcmp.eq.s32.totalorder %v1040, 1
    %vm1105 = vcmp.eq.s32.totalorder %v1041, 1
    %vm1106 = vcmp.eq.s32.totalorder %v1042, 1
    %vm1107 = vcmp.eq.s32.totalorder %v1043, 1
    %vm1108 = vcmp.eq.s32.totalorder %v1044, 1
    %vm1109 = vcmp.eq.s32.totalorder %v1045, 1
    %vm1110 = vcmp.eq.s32.totalorder %v1046, 1
    %vm1111 = vcmp.eq.s32.totalorder %v1047, 1
    %vm1112 = vcmp.eq.s32.totalorder %v1048, 1
    %vm1113 = vcmp.eq.s32.totalorder %v1049, 1
    %vm1114 = vcmp.eq.s32.totalorder %v1050, 1
    %vm1115 = vcmp.eq.s32.totalorder %v1051, 1
    %vm1116 = vcmp.eq.s32.totalorder %v1052, 1
    %vm1117 = vcmp.eq.s32.totalorder %v1053, 1
    %vm1118 = vcmp.eq.s32.totalorder %v1054, 1
    %vm1119 = vcmp.eq.s32.totalorder %v1055, 1
    %vm1120 = vcmp.eq.s32.totalorder %v1056, 1
    %vm1121 = vcmp.eq.s32.totalorder %v1057, 1
    %vm1122 = vcmp.eq.s32.totalorder %v1058, 1
    %vm1123 = vcmp.eq.s32.totalorder %v1059, 1
    %vm1124 = vcmp.eq.s32.totalorder %v1060, 1
    %vm1125 = vcmp.eq.s32.totalorder %v1061, 1
    %vm1126 = vcmp.eq.s32.totalorder %v1062, 1
    %vm1127 = vcmp.eq.s32.totalorder %v1063, 1
    %vm1128 = vcmp.eq.s32.totalorder %v1064, 1
    %vm1129 = vcmp.eq.s32.totalorder %v1065, 1
    %vm1130 = vcmp.eq.s32.totalorder %v1066, 1
    %vm1131 = vcmp.eq.s32.totalorder %v1067, 1
    %vm1132 = vcmp.eq.s32.totalorder %v1068, 1
    %vm1133 = vcmp.eq.s32.totalorder %v1069, 1
    %vm1134 = vcmp.eq.s32.totalorder %v1070, 1
    %vm1135 = vcmp.eq.s32.totalorder %v1071, 1
    %vm1136 = vcmp.eq.s32.totalorder %v1072, 1
    %vm1137 = vcmp.eq.s32.totalorder %v1073, 1
    %vm1138 = vcmp.eq.s32.totalorder %v1074, 1
    %vm1139 = vcmp.eq.s32.totalorder %v1075, 1
    %vm1140 = vcmp.eq.s32.totalorder %v1076, 1
    %vm1141 = vcmp.eq.s32.totalorder %v1077, 1
    %vm1142 = vcmp.eq.s32.totalorder %v1078, 1
    %vm1143 = vcmp.eq.s32.totalorder %v1079, 1
    %vm1144 = vcmp.eq.s32.totalorder %v1080, 1
    %vm1145 = vcmp.eq.s32.totalorder %v1081, 1
    %vm1146 = vcmp.eq.s32.totalorder %v1082, 1
    %vm1147 = vcmp.eq.s32.totalorder %v1083, 1
    %vm1148 = vcmp.eq.s32.totalorder %v1084, 1
    %vm1149 = vcmp.eq.s32.totalorder %v1085, 1
    %vm1150 = vcmp.eq.s32.totalorder %v1086, 1
    %vm1151 = vcmp.eq.s32.totalorder %v1087, 1
    %vm1152 = vcmp.eq.s32.totalorder %v1088, 1
    %vm1153 = vcmp.eq.s32.totalorder %v1089, 1
    %vm1154 = vcmp.eq.s32.totalorder %v1090, 1
    %vm1155 = vcmp.eq.s32.totalorder %v1091, 1
    %vm1156 = vcmp.eq.s32.totalorder %v1092, 1
    %v1157 = vsel %vm1093, %v260, 0.0
    %v1158 = vsel %vm1094, %v263, 0.0
    %v1159 = vsel %vm1095, %v268, 0.0
    %v1160 = vsel %vm1096, %v271, 0.0
    %v1161 = vsel %vm1097, %v276, 0.0
    %v1162 = vsel %vm1098, %v279, 0.0
    %v1163 = vsel %vm1099, %v284, 0.0
    %v1164 = vsel %vm1100, %v287, 0.0
    %v1165 = vsel %vm1101, %v292, 0.0
    %v1166 = vsel %vm1102, %v295, 0.0
    %v1167 = vsel %vm1103, %v300, 0.0
    %v1168 = vsel %vm1104, %v303, 0.0
    %v1169 = vsel %vm1105, %v308, 0.0
    %v1170 = vsel %vm1106, %v311, 0.0
    %v1171 = vsel %vm1107, %v316, 0.0
    %v1172 = vsel %vm1108, %v319, 0.0
    %v1173 = vsel %vm1109, %v324, 0.0
    %v1174 = vsel %vm1110, %v327, 0.0
    %v1175 = vsel %vm1111, %v332, 0.0
    %v1176 = vsel %vm1112, %v335, 0.0
    %v1177 = vsel %vm1113, %v340, 0.0
    %v1178 = vsel %vm1114, %v343, 0.0
    %v1179 = vsel %vm1115, %v348, 0.0
    %v1180 = vsel %vm1116, %v351, 0.0
    %v1181 = vsel %vm1117, %v356, 0.0
    %v1182 = vsel %vm1118, %v359, 0.0
    %v1183 = vsel %vm1119, %v364, 0.0
    %v1184 = vsel %vm1120, %v367, 0.0
    %v1185 = vsel %vm1121, %v372, 0.0
    %v1186 = vsel %vm1122, %v375, 0.0
    %v1187 = vsel %vm1123, %v380, 0.0
    %v1188 = vsel %vm1124, %v383, 0.0
    %v1189 = vsel %vm1125, %v388, 0.0
    %v1190 = vsel %vm1126, %v391, 0.0
    %v1191 = vsel %vm1127, %v396, 0.0
    %v1192 = vsel %vm1128, %v399, 0.0
    %v1193 = vsel %vm1129, %v404, 0.0
    %v1194 = vsel %vm1130, %v407, 0.0
    %v1195 = vsel %vm1131, %v412, 0.0
    %v1196 = vsel %vm1132, %v415, 0.0
    %v1197 = vsel %vm1133, %v420, 0.0
    %v1198 = vsel %vm1134, %v423, 0.0
    %v1199 = vsel %vm1135, %v428, 0.0
    %v1200 = vsel %vm1136, %v431, 0.0
    %v1201 = vsel %vm1137, %v436, 0.0
    %v1202 = vsel %vm1138, %v439, 0.0
    %v1203 = vsel %vm1139, %v444, 0.0
    %v1204 = vsel %vm1140, %v447, 0.0
    %v1205 = vsel %vm1141, %v452, 0.0
    %v1206 = vsel %vm1142, %v455, 0.0
    %v1207 = vsel %vm1143, %v460, 0.0
    %v1208 = vsel %vm1144, %v463, 0.0
    %v1209 = vsel %vm1145, %v468, 0.0
    %v1210 = vsel %vm1146, %v471, 0.0
    %v1211 = vsel %vm1147, %v476, 0.0
    %v1212 = vsel %vm1148, %v479, 0.0
    %v1213 = vsel %vm1149, %v484, 0.0
    %v1214 = vsel %vm1150, %v487, 0.0
    %v1215 = vsel %vm1151, %v492, 0.0
    %v1216 = vsel %vm1152, %v495, 0.0
    %v1217 = vsel %vm1153, %v500, 0.0
    %v1218 = vsel %vm1154, %v503, 0.0
    %v1219 = vsel %vm1155, %v508, 0.0
    %v1220 = vsel %vm1156, %v511, 0.0
    %v1221 = vadd.f32 %v1157, %v1158
    %v1222 = vadd.f32 %v1221, %v1159
    %v1223 = vadd.f32 %v1222, %v1160
    %v1224 = vadd.f32 %v1223, %v1161
    %v1225 = vadd.f32 %v1224, %v1162
    %v1226 = vadd.f32 %v1225, %v1163
    %v1227 = vadd.f32 %v1226, %v1164
    %v1228 = vadd.f32 %v1227, %v1165
    %v1229 = vadd.f32 %v1228, %v1166
    %v1230 = vadd.f32 %v1229, %v1167
    %v1231 = vadd.f32 %v1230, %v1168
    %v1232 = vadd.f32 %v1231, %v1169
    %v1233 = vadd.f32 %v1232, %v1170
    %v1234 = vadd.f32 %v1233, %v1171
    %v1235 = vadd.f32 %v1234, %v1172
    %v1236 = vadd.f32 %v1235, %v1173
    %v1237 = vadd.f32 %v1236, %v1174
    %v1238 = vadd.f32 %v1237, %v1175
    %v1239 = vadd.f32 %v1238, %v1176
    %v1240 = vadd.f32 %v1239, %v1177
    %v1241 = vadd.f32 %v1240, %v1178
    %v1242 = vadd.f32 %v1241, %v1179
    %v1243 = vadd.f32 %v1242, %v1180
    %v1244 = vadd.f32 %v1243, %v1181
    %v1245 = vadd.f32 %v1244, %v1182
    %v1246 = vadd.f32 %v1245, %v1183
    %v1247 = vadd.f32 %v1246, %v1184
    %v1248 = vadd.f32 %v1247, %v1185
    %v1249 = vadd.f32 %v1248, %v1186
    %v1250 = vadd.f32 %v1249, %v1187
    %v1251 = vadd.f32 %v1250, %v1188
    %v1252 = vadd.f32 %v1251, %v1189
    %v1253 = vadd.f32 %v1252, %v1190
    %v1254 = vadd.f32 %v1253, %v1191
    %v1255 = vadd.f32 %v1254, %v1192
    %v1256 = vadd.f32 %v1255, %v1193
    %v1257 = vadd.f32 %v1256, %v1194
    %v1258 = vadd.f32 %v1257, %v1195
    %v1259 = vadd.f32 %v1258, %v1196
    %v1260 = vadd.f32 %v1259, %v1197
    %v1261 = vadd.f32 %v1260, %v1198
    %v1262 = vadd.f32 %v1261, %v1199
    %v1263 = vadd.f32 %v1262, %v1200
    %v1264 = vadd.f32 %v1263, %v1201
    %v1265 = vadd.f32 %v1264, %v1202
    %v1266 = vadd.f32 %v1265, %v1203
    %v1267 = vadd.f32 %v1266, %v1204
    %v1268 = vadd.f32 %v1267, %v1205
    %v1269 = vadd.f32 %v1268, %v1206
    %v1270 = vadd.f32 %v1269, %v1207
    %v1271 = vadd.f32 %v1270, %v1208
    %v1272 = vadd.f32 %v1271, %v1209
    %v1273 = vadd.f32 %v1272, %v1210
    %v1274 = vadd.f32 %v1273, %v1211
    %v1275 = vadd.f32 %v1274, %v1212
    %v1276 = vadd.f32 %v1275, %v1213
    %v1277 = vadd.f32 %v1276, %v1214
    %v1278 = vadd.f32 %v1277, %v1215
    %v1279 = vadd.f32 %v1278, %v1216
    %v1280 = vadd.f32 %v1279, %v1217
    %v1281 = vadd.f32 %v1280, %v1218
    %v1282 = vadd.f32 %v1281, %v1219
    %v1283 = vadd.f32 %v1282, %v1220
    %v1284 = vrot.slane %v1283, 4
    %v1285 = vadd.f32 %v1283, %v1284
    %v1286 = vrot.slane %v1285, 2
    %v1287 = vadd.f32 %v1285, %v1286
    %v1288 = vrot.slane %v1287, 1
    %v1289 = vadd.f32 %v1287, %v1288
    %1290 = vst [vmem:[#allocation4] sm:$0x1] %v1289
    %v1291 = vmul.f32 %v1157, %v1157
    %v1292 = vmul.f32 %v1158, %v1158
    %v1293 = vmul.f32 %v1159, %v1159
    %v1294 = vmul.f32 %v1160, %v1160
    %v1295 = vmul.f32 %v1161, %v1161
    %v1296 = vmul.f32 %v1162, %v1162
    %v1297 = vmul.f32 %v1163, %v1163
    %v1298 = vmul.f32 %v1164, %v1164
    %v1299 = vmul.f32 %v1165, %v1165
    %v1300 = vmul.f32 %v1166, %v1166
    %v1301 = vmul.f32 %v1167, %v1167
    %v1302 = vmul.f32 %v1168, %v1168
    %v1303 = vmul.f32 %v1169, %v1169
    %v1304 = vmul.f32 %v1170, %v1170
    %v1305 = vmul.f32 %v1171, %v1171
    %v1306 = vmul.f32 %v1172, %v1172
    %v1307 = vmul.f32 %v1173, %v1173
    %v1308 = vmul.f32 %v1174, %v1174
    %v1309 = vmul.f32 %v1175, %v1175
    %v1310 = vmul.f32 %v1176, %v1176
    %v1311 = vmul.f32 %v1177, %v1177
    %v1312 = vmul.f32 %v1178, %v1178
    %v1313 = vmul.f32 %v1179, %v1179
    %v1314 = vmul.f32 %v1180, %v1180
    %v1315 = vmul.f32 %v1181, %v1181
    %v1316 = vmul.f32 %v1182, %v1182
    %v1317 = vmul.f32 %v1183, %v1183
    %v1318 = vmul.f32 %v1184, %v1184
    %v1319 = vmul.f32 %v1185, %v1185
    %v1320 = vmul.f32 %v1186, %v1186
    %v1321 = vmul.f32 %v1187, %v1187
    %v1322 = vmul.f32 %v1188, %v1188
    %v1323 = vmul.f32 %v1189, %v1189
    %v1324 = vmul.f32 %v1190, %v1190
    %v1325 = vmul.f32 %v1191, %v1191
    %v1326 = vmul.f32 %v1192, %v1192
    %v1327 = vmul.f32 %v1193, %v1193
    %v1328 = vmul.f32 %v1194, %v1194
    %v1329 = vmul.f32 %v1195, %v1195
    %v1330 = vmul.f32 %v1196, %v1196
    %v1331 = vmul.f32 %v1197, %v1197
    %v1332 = vmul.f32 %v1198, %v1198
    %v1333 = vmul.f32 %v1199, %v1199
    %v1334 = vmul.f32 %v1200, %v1200
    %v1335 = vmul.f32 %v1201, %v1201
    %v1336 = vmul.f32 %v1202, %v1202
    %v1337 = vmul.f32 %v1203, %v1203
    %v1338 = vmul.f32 %v1204, %v1204
    %v1339 = vmul.f32 %v1205, %v1205
    %v1340 = vmul.f32 %v1206, %v1206
    %v1341 = vmul.f32 %v1207, %v1207
    %v1342 = vmul.f32 %v1208, %v1208
    %v1343 = vmul.f32 %v1209, %v1209
    %v1344 = vmul.f32 %v1210, %v1210
    %v1345 = vmul.f32 %v1211, %v1211
    %v1346 = vmul.f32 %v1212, %v1212
    %v1347 = vmul.f32 %v1213, %v1213
    %v1348 = vmul.f32 %v1214, %v1214
    %v1349 = vmul.f32 %v1215, %v1215
    %v1350 = vmul.f32 %v1216, %v1216
    %v1351 = vmul.f32 %v1217, %v1217
    %v1352 = vmul.f32 %v1218, %v1218
    %v1353 = vmul.f32 %v1219, %v1219
    %v1354 = vmul.f32 %v1220, %v1220
    %v1355 = vadd.f32 %v1291, %v1292
    %v1356 = vadd.f32 %v1355, %v1293
    %v1357 = vadd.f32 %v1356, %v1294
    %v1358 = vadd.f32 %v1357, %v1295
    %v1359 = vadd.f32 %v1358, %v1296
    %v1360 = vadd.f32 %v1359, %v1297
    %v1361 = vadd.f32 %v1360, %v1298
    %v1362 = vadd.f32 %v1361, %v1299
    %v1363 = vadd.f32 %v1362, %v1300
    %v1364 = vadd.f32 %v1363, %v1301
    %v1365 = vadd.f32 %v1364, %v1302
    %v1366 = vadd.f32 %v1365, %v1303
    %v1367 = vadd.f32 %v1366, %v1304
    %v1368 = vadd.f32 %v1367, %v1305
    %v1369 = vadd.f32 %v1368, %v1306
    %v1370 = vadd.f32 %v1369, %v1307
    %v1371 = vadd.f32 %v1370, %v1308
    %v1372 = vadd.f32 %v1371, %v1309
    %v1373 = vadd.f32 %v1372, %v1310
    %v1374 = vadd.f32 %v1373, %v1311
    %v1375 = vadd.f32 %v1374, %v1312
    %v1376 = vadd.f32 %v1375, %v1313
    %v1377 = vadd.f32 %v1376, %v1314
    %v1378 = vadd.f32 %v1377, %v1315
    %v1379 = vadd.f32 %v1378, %v1316
    %v1380 = vadd.f32 %v1379, %v1317
    %v1381 = vadd.f32 %v1380, %v1318
    %v1382 = vadd.f32 %v1381, %v1319
    %v1383 = vadd.f32 %v1382, %v1320
    %v1384 = vadd.f32 %v1383, %v1321
    %v1385 = vadd.f32 %v1384, %v1322
    %v1386 = vadd.f32 %v1385, %v1323
    %v1387 = vadd.f32 %v1386, %v1324
    %v1388 = vadd.f32 %v1387, %v1325
    %v1389 = vadd.f32 %v1388, %v1326
    %v1390 = vadd.f32 %v1389, %v1327
    %v1391 = vadd.f32 %v1390, %v1328
    %v1392 = vadd.f32 %v1391, %v1329
    %v1393 = vadd.f32 %v1392, %v1330
    %v1394 = vadd.f32 %v1393, %v1331
    %v1395 = vadd.f32 %v1394, %v1332
    %v1396 = vadd.f32 %v1395, %v1333
    %v1397 = vadd.f32 %v1396, %v1334
    %v1398 = vadd.f32 %v1397, %v1335
    %v1399 = vadd.f32 %v1398, %v1336
    %v1400 = vadd.f32 %v1399, %v1337
    %v1401 = vadd.f32 %v1400, %v1338
    %v1402 = vadd.f32 %v1401, %v1339
    %v1403 = vadd.f32 %v1402, %v1340
    %v1404 = vadd.f32 %v1403, %v1341
    %v1405 = vadd.f32 %v1404, %v1342
    %v1406 = vadd.f32 %v1405, %v1343
    %v1407 = vadd.f32 %v1406, %v1344
    %v1408 = vadd.f32 %v1407, %v1345
    %v1409 = vadd.f32 %v1408, %v1346
    %v1410 = vadd.f32 %v1409, %v1347
    %v1411 = vadd.f32 %v1410, %v1348
    %v1412 = vadd.f32 %v1411, %v1349
    %v1413 = vadd.f32 %v1412, %v1350
    %v1414 = vadd.f32 %v1413, %v1351
    %v1415 = vadd.f32 %v1414, %v1352
    %v1416 = vadd.f32 %v1415, %v1353
    %v1417 = vadd.f32 %v1416, %v1354
    %v1418 = vrot.slane %v1417, 4
    %v1419 = vadd.f32 %v1417, %v1418
    %v1420 = vrot.slane %v1419, 2
    %v1421 = vadd.f32 %v1419, %v1420
    %v1422 = vrot.slane %v1421, 1
    %v1423 = vadd.f32 %v1421, %v1422
    %1424 = vst [vmem:[#allocation6] sm:$0x1] %v1423
    // Predicated region
    $region14: #{tpu_custom_call.1} parent=1 // pred_check
      _
    $region15: #{tpu_custom_call.1} parent=1 // pred_check_branch
      %1426 = sbr.rel (0) target = $region17
    $region16: #{tpu_custom_call.1} parent=1 // pred_region
      %s1428 = ssub.s32 4096, 4096
      %1429 = vsyncadd [#allocation3], %s1428
      %s1430 = sshll.u32 [#allocation2], 4
      %s1431 = int_to_ptr.vmem [resolvable:$true] %s1430
      %1436 = dma.vmem_to_hbm [thread:$0]  %s1431, 4096, %s3, [#allocation3], 64, 64, 4
    $region17: #{tpu_custom_call.1} parent=1 // pred_fallthru
      _
    // Predicated region
    $region18: #{tpu_custom_call.1} parent=1 // pred_check
      _
    $region19: #{tpu_custom_call.1} parent=1 // pred_check_branch
      %1438 = sbr.rel (0) target = $region21
    $region20: #{tpu_custom_call.1} parent=1 // pred_region
      %s1440 = ssub.s32 16, 16
      %1441 = vsyncadd [#allocation5], %s1440
      %s1443 = sshll.u32 [#allocation4], 4
      %s1444 = int_to_ptr.vmem [resolvable:$true] %s1443
      %1446 = dma.vmem_to_hbm [thread:$0]  %s1444, 16, %s4, [#allocation5]
    $region21: #{tpu_custom_call.1} parent=1 // pred_fallthru
      _
    // Predicated region
    $region22: #{tpu_custom_call.1} parent=1 // pred_check
      _
    $region23: #{tpu_custom_call.1} parent=1 // pred_check_branch
      %1448 = sbr.rel (0) target = $region25
    $region24: #{tpu_custom_call.1} parent=1 // pred_region
      %s1450 = ssub.s32 16, 16
      %1451 = vsyncadd [#allocation5], %s1450
      %s1453 = sshll.u32 [#allocation6], 4
      %s1454 = int_to_ptr.vmem [resolvable:$true] %s1453
      %1456 = dma.vmem_to_hbm [thread:$0]  %s1454, 16, %s5, [#allocation5]
    $region25: #{tpu_custom_call.1} parent=1 // pred_fallthru
      _
    // Predicated region
    $region26: #{tpu_custom_call.1} parent=1 // pred_check
      _
    $region27: #{tpu_custom_call.1} parent=1 // pred_check_branch
      %1458 = sbr.rel (0) target = $region29
    $region28: #{tpu_custom_call.1} parent=1 // pred_region
      %1459 = dma.done [#allocation3], 4096
    $region29: #{tpu_custom_call.1} parent=1 // pred_fallthru
      _
    // Predicated region
    $region30: #{tpu_custom_call.1} parent=1 // pred_check
      _
    $region31: #{tpu_custom_call.1} parent=1 // pred_check_branch
      %1461 = sbr.rel (0) target = $region33
    $region32: #{tpu_custom_call.1} parent=1 // pred_region
      %1462 = dma.done [#allocation5], 16
    $region33: #{tpu_custom_call.1} parent=1 // pred_fallthru
      _
    // Predicated region
    $region34: #{tpu_custom_call.1} parent=1 // pred_check
      _
    $region35: #{tpu_custom_call.1} parent=1 // pred_check_branch
      %1464 = sbr.rel (0) target = $region37
    $region36: #{tpu_custom_call.1} parent=1 // pred_region
      %1465 = dma.done [#allocation5], 16
    $region37: #{tpu_custom_call.1} parent=1 // pred_fallthru
      _
    %1466 = vsyncpa [#allocation3], 1
    %1467 = vsyncpa [#allocation5], 1

</llo_original>
